<compile_context>
chip_gen: v7x
topology: tpu7x:2x2x1
jax: 0.10.0
libtpu: 0.0.40
codegen_flags: <defaults>
</compile_context>

<pallas_src>
import math

import jax
import jax.numpy as jnp
from jax.experimental import pallas as pl
from jax.experimental.pallas import tpu as pltpu

_TAYLOR_DEG = 11  # degree-11 Taylor: remainder ~2e-9 for ||A||_1 <= 1 (f32 accurate)
_COEFFS = [1.0 / math.factorial(k) for k in range(_TAYLOR_DEG + 1)]


def spd_linear_kernel(nsq_ref, w_ref, x_ref, y_ref, e_ref):
    """y_tile = x_tile @ expm(triu(W) + triu(W,1)^T); expm kept in VMEM scratch.

    w_ref already holds W * 2^-s (pre-scaled host-side), nsq_ref holds s.
    """

    @pl.when(pl.program_id(0) == 0)
    def _compute_expm():
        w = w_ref[...].astype(jnp.float32)
        n = w.shape[0]

        # --- Symmetric parametrization: S = triu(W) + triu(W,1)^T
        #     == where(col >= row, W, W^T)  (single transpose + single select).
        #     Scaling by 2^-s commutes with this, so A below already has
        #     ||A||_1 <= 1.
        row = jax.lax.broadcasted_iota(jnp.int32, (n, n), 0)
        col = jax.lax.broadcasted_iota(jnp.int32, (n, n), 1)
        A = jnp.where(col >= row, w, w.T)

        # --- Degree-11 Taylor of exp(A) via Paterson–Stockmeyer (5 matmuls):
        #     exp(A) ~= C0 + A^4 @ (C1 + A^4 @ C2),  Ci degree-3 chunks.
        eye = jnp.eye(n, dtype=jnp.float32)
        A2 = jnp.dot(A, A, preferred_element_type=jnp.float32)
        A3 = jnp.dot(A2, A, preferred_element_type=jnp.float32)
        A4 = jnp.dot(A2, A2, preferred_element_type=jnp.float32)
        c = _COEFFS
        C0 = c[0] * eye + c[1] * A + c[2] * A2 + c[3] * A3
        C1 = c[4] * eye + c[5] * A + c[6] * A2 + c[7] * A3
        C2 = c[8] * eye + c[9] * A + c[10] * A2 + c[11] * A3
        inner = C1 + jnp.dot(A4, C2, preferred_element_type=jnp.float32)
        e_ref[...] = C0 + jnp.dot(A4, inner, preferred_element_type=jnp.float32)

        # --- Dynamic squaring: expm(S) = E^(2^s); exactly s squarings execute.
        @pl.loop(0, nsq_ref[0])
        def _square(_):
            e_cur = e_ref[...]
            e_ref[...] = jnp.dot(e_cur, e_cur, preferred_element_type=jnp.float32)

    # --- Linear (no bias): y = x @ expm(S)^T.  S symmetric => expm(S) symmetric,
    #     so E.T == E (exact up to fp rounding of the expm itself) -> no transpose.
    x = x_ref[...].astype(jnp.float32)
    y_ref[...] = jnp.dot(x, e_ref[...], preferred_element_type=jnp.float32).astype(
        y_ref.dtype
    )


def symmetric_positive_definite(x, w, *, max_batch_tile=256):
    """Forward of SymmetricPositiveDefinite: x @ matrix_exp(symmetrize(W))^T."""
    B, n = x.shape
    assert w.shape == (n, n)

    # Host-side scalar prep: s = #squarings so that ||S / 2^s||_1 <= 1.
    # (1-norm = max column abs sum; equals inf-norm here since S is symmetric.)
    S = jnp.triu(w) + jnp.triu(w, 1).T
    nrm1 = jnp.max(jnp.sum(jnp.abs(S), axis=0))
    s = jnp.maximum(jnp.ceil(jnp.log2(jnp.maximum(nrm1, 1e-30))), 0.0)
    s = jnp.minimum(s, 60.0)  # safety clamp for pathological inputs
    nsq = s.astype(jnp.int32).reshape(1)
    w_scaled = w.astype(jnp.float32) * jnp.exp2(-s)

    # Lane/sublane-friendly padding: features -> multiple of 128 (lane-dense
    # stores), batch -> multiple of the batch tile (itself a multiple of 8).
    # Zero padding is exact: S_pad is block-diag(S, 0) -> expm = blockdiag(expm(S), I),
    # and the padded x columns are zero, so y[:B, :n] is untouched.
    n_pad = max(128, pl.cdiv(n, 128) * 128)
    b_tile = min(max_batch_tile, pl.cdiv(B, 8) * 8)
    B_pad = pl.cdiv(B, b_tile) * b_tile

    w_p = jnp.zeros((n_pad, n_pad), jnp.float32).at[:n, :n].set(w_scaled)
    x_p = jnp.zeros((B_pad, n_pad), jnp.float32).at[:B, :n].set(x)

    # Advisory cost hint: ~8 serial n^3 matmuls (PS + typical squarings) + streaming x@E.
    flops = 2 * (n_pad ** 3) * 8 + 2 * B_pad * n_pad * n_pad
    bytes_accessed = 4 * (n_pad * n_pad + 2 * B_pad * n_pad) + 4

    y_p = pl.pallas_call(
        spd_linear_kernel,
        out_shape=jax.ShapeDtypeStruct((B_pad, n_pad), jnp.float32),
        grid_spec=pltpu.PrefetchScalarGridSpec(
            num_scalar_prefetch=1,          # nsq -> SMEM
            grid=(B_pad // b_tile,),
            in_specs=[
                pl.BlockSpec((n_pad, n_pad), lambda b, nsq: (0, 0)),   # W (resident)
                pl.BlockSpec((b_tile, n_pad), lambda b, nsq: (b, 0)),  # x tile
            ],
            out_specs=pl.BlockSpec((b_tile, n_pad), lambda b, nsq: (b, 0)),
            scratch_shapes=[pltpu.VMEM((n_pad, n_pad), jnp.float32)],  # E = expm(S)
        ),
        compiler_params=pltpu.CompilerParams(
            # E is computed once at grid step 0 and reused by later steps, so the
            # batch axis must stay serial ("arbitrary"), not megacore-sharded.
            dimension_semantics=("arbitrary",),
            vmem_limit_bytes=32 * 1024 * 1024,
        ),
        cost_estimate=pl.CostEstimate(
            flops=flops,
            transcendentals=0,
            bytes_accessed=bytes_accessed,
        ),
    )(nsq, w_p, x_p)
    return y_p[:B, :n]


def _reference(x, w):
    """Pure-JAX reference mirroring the PyTorch module semantics."""
    S = jnp.triu(w) + jnp.triu(w, 1).T
    W_eff = jax.scipy.linalg.expm(S)
    return x @ W_eff.T


if __name__ == "__main__":
    in_features = 32
    batch = 8

    key = jax.random.PRNGKey(0)
    kw, kx = jax.random.split(key)

    # nn.Linear default init: U(-1/sqrt(in_features), 1/sqrt(in_features))
    bound = 1.0 / math.sqrt(in_features)
    w = jax.random.uniform(kw, (in_features, in_features),
                           minval=-bound, maxval=bound, dtype=jnp.float32)
    x = jax.random.normal(kx, (batch, in_features), dtype=jnp.float32)

    y = symmetric_positive_definite(x, w)
    y = jax.block_until_ready(y)

    y_ref = _reference(x, w)
    assert y.shape == (batch, in_features)
    assert jnp.allclose(y, y_ref, rtol=1e-3, atol=1e-3), (
        f"max abs err {jnp.max(jnp.abs(y - y_ref))}")

    print("KERNEL_OK")
</pallas_src>

<mosaic_0001>
module attributes {stable_mosaic.version = 11 : i64} {
  func.func @spd_linear_kernel(%arg0: i32, %arg1: memref<1xi32, #tpu.memory_space<smem>>, %arg2: memref<128x128xf32, #tpu.memory_space<vmem>>, %arg3: memref<8x128xf32, #tpu.memory_space<vmem>>, %arg4: memref<8x128xf32, #tpu.memory_space<vmem>>, %arg5: memref<128x128xf32, #tpu.memory_space<vmem>>) attributes {dimension_semantics = [#tpu.dimension_semantics<arbitrary>], iteration_bounds = array<i64: 1>, scalar_prefetch = 1 : i64, scratch_operands = 1 : i64, tpu.core_type = #tpu.core_type<tc>, window_params = [{pipeline_mode = #tpu.pipeline_mode<synchronous>, transform_indices = @transform_0, window_bounds = array<i64: 128, 128>}, {transform_indices = @transform_1, window_bounds = array<i64: 8, 128>}, {transform_indices = @transform_2, window_bounds = array<i64: 8, 128>}]} {
    %c0_i32 = arith.constant 0 : i32
    %0 = arith.cmpi eq, %arg0, %c0_i32 : i32
    %1 = arith.extui %0 : i1 to i32
    %c0_i32_0 = arith.constant 0 : i32
    %2 = arith.cmpi ne, %1, %c0_i32_0 : i32
    scf.if %2 {
      %c0_6 = arith.constant 0 : index
      %c0_7 = arith.constant 0 : index
      %7 = vector.load %arg2[%c0_6, %c0_7] : memref<128x128xf32, #tpu.memory_space<vmem>>, vector<128x128xf32>
      %8 = tpu.iota {dimensions = array<i32: 0>} : vector<128x128xi32>
      %9 = tpu.iota {dimensions = array<i32: 1>} : vector<128x128xi32>
      %10 = arith.cmpi sge, %9, %8 : vector<128x128xi32>
      %11 = tpu.transpose %7, [1, 0] : vector<128x128xf32> -> vector<128x128xf32>
      %12 = arith.select %10, %7, %11 : vector<128x128xi1>, vector<128x128xf32>
      %13 = tpu.iota {dimensions = array<i32: 0>} : vector<128x128xi32>
      %14 = tpu.iota {dimensions = array<i32: 1>} : vector<128x128xi32>
      %c0_i32_8 = arith.constant 0 : i32
      %15 = vector.broadcast %c0_i32_8 : i32 to vector<128x128xi32>
      %16 = arith.addi %13, %15 : vector<128x128xi32>
      %17 = arith.cmpi eq, %16, %14 : vector<128x128xi32>
      %18 = arith.extui %17 : vector<128x128xi1> to vector<128x128xi32>
      %19 = arith.sitofp %18 : vector<128x128xi32> to vector<128x128xf32>
      %cst_9 = arith.constant dense<0.000000e+00> : vector<128x128xf32>
      %20 = tpu.matmul %12, %12, %cst_9 {dimension_numbers = #tpu.dot_dimension_numbers<[1], [0], [0], [1], [0, 0, 1, 1], [], []>} : vector<128x128xf32>, vector<128x128xf32>, vector<128x128xf32> -> vector<128x128xf32>
      %cst_10 = arith.constant dense<0.000000e+00> : vector<128x128xf32>
      %21 = tpu.matmul %20, %12, %cst_10 {dimension_numbers = #tpu.dot_dimension_numbers<[1], [0], [0], [1], [0, 0, 1, 1], [], []>} : vector<128x128xf32>, vector<128x128xf32>, vector<128x128xf32> -> vector<128x128xf32>
      %cst_11 = arith.constant dense<0.000000e+00> : vector<128x128xf32>
      %22 = tpu.matmul %20, %20, %cst_11 {dimension_numbers = #tpu.dot_dimension_numbers<[1], [0], [0], [1], [0, 0, 1, 1], [], []>} : vector<128x128xf32>, vector<128x128xf32>, vector<128x128xf32> -> vector<128x128xf32>
      %cst_12 = arith.constant 1.000000e+00 : f32
      %23 = vector.broadcast %cst_12 : f32 to vector<128x128xf32>
      %24 = arith.mulf %23, %19 : vector<128x128xf32>
      %cst_13 = arith.constant 1.000000e+00 : f32
      %25 = vector.broadcast %cst_13 : f32 to vector<128x128xf32>
      %26 = arith.mulf %25, %12 : vector<128x128xf32>
      %27 = arith.addf %24, %26 : vector<128x128xf32>
      %cst_14 = arith.constant 5.000000e-01 : f32
      %28 = vector.broadcast %cst_14 : f32 to vector<128x128xf32>
      %29 = arith.mulf %28, %20 : vector<128x128xf32>
      %30 = arith.addf %27, %29 : vector<128x128xf32>
      %cst_15 = arith.constant 0.166666672 : f32
      %31 = vector.broadcast %cst_15 : f32 to vector<128x128xf32>
      %32 = arith.mulf %31, %21 : vector<128x128xf32>
      %33 = arith.addf %30, %32 : vector<128x128xf32>
      %cst_16 = arith.constant 0.0416666679 : f32
      %34 = vector.broadcast %cst_16 : f32 to vector<128x128xf32>
      %35 = arith.mulf %34, %19 : vector<128x128xf32>
      %cst_17 = arith.constant 0.00833333377 : f32
      %36 = vector.broadcast %cst_17 : f32 to vector<128x128xf32>
      %37 = arith.mulf %36, %12 : vector<128x128xf32>
      %38 = arith.addf %35, %37 : vector<128x128xf32>
      %cst_18 = arith.constant 0.00138888892 : f32
      %39 = vector.broadcast %cst_18 : f32 to vector<128x128xf32>
      %40 = arith.mulf %39, %20 : vector<128x128xf32>
      %41 = arith.addf %38, %40 : vector<128x128xf32>
      %cst_19 = arith.constant 1.98412701E-4 : f32
      %42 = vector.broadcast %cst_19 : f32 to vector<128x128xf32>
      %43 = arith.mulf %42, %21 : vector<128x128xf32>
      %44 = arith.addf %41, %43 : vector<128x128xf32>
      %cst_20 = arith.constant 2.48015876E-5 : f32
      %45 = vector.broadcast %cst_20 : f32 to vector<128x128xf32>
      %46 = arith.mulf %45, %19 : vector<128x128xf32>
      %cst_21 = arith.constant 2.75573188E-6 : f32
      %47 = vector.broadcast %cst_21 : f32 to vector<128x128xf32>
      %48 = arith.mulf %47, %12 : vector<128x128xf32>
      %49 = arith.addf %46, %48 : vector<128x128xf32>
      %cst_22 = arith.constant 2.755732E-7 : f32
      %50 = vector.broadcast %cst_22 : f32 to vector<128x128xf32>
      %51 = arith.mulf %50, %20 : vector<128x128xf32>
      %52 = arith.addf %49, %51 : vector<128x128xf32>
      %cst_23 = arith.constant 2.50521079E-8 : f32
      %53 = vector.broadcast %cst_23 : f32 to vector<128x128xf32>
      %54 = arith.mulf %53, %21 : vector<128x128xf32>
      %55 = arith.addf %52, %54 : vector<128x128xf32>
      %cst_24 = arith.constant dense<0.000000e+00> : vector<128x128xf32>
      %56 = tpu.matmul %22, %55, %cst_24 {dimension_numbers = #tpu.dot_dimension_numbers<[1], [0], [0], [1], [0, 0, 1, 1], [], []>} : vector<128x128xf32>, vector<128x128xf32>, vector<128x128xf32> -> vector<128x128xf32>
      %57 = arith.addf %44, %56 : vector<128x128xf32>
      %cst_25 = arith.constant dense<0.000000e+00> : vector<128x128xf32>
      %58 = tpu.matmul %22, %57, %cst_25 {dimension_numbers = #tpu.dot_dimension_numbers<[1], [0], [0], [1], [0, 0, 1, 1], [], []>} : vector<128x128xf32>, vector<128x128xf32>, vector<128x128xf32> -> vector<128x128xf32>
      %59 = arith.addf %33, %58 : vector<128x128xf32>
      %c0_26 = arith.constant 0 : index
      %c0_27 = arith.constant 0 : index
      %60 = vector.load %arg5[%c0_26, %c0_27] : memref<128x128xf32, #tpu.memory_space<vmem>>, vector<128x128xf32>
      tpu.vector_store %arg5[%c0_26, %c0_27], %59 {strides = array<i32>} : memref<128x128xf32, #tpu.memory_space<vmem>>, vector<128x128xf32>,
      %c0_28 = arith.constant 0 : index
      %61 = memref.load %arg1[%c0_28] : memref<1xi32, #tpu.memory_space<smem>>
      %c0_i32_29 = arith.constant 0 : i32
      %62 = arith.subi %61, %c0_i32_29 : i32
      %c1_i32 = arith.constant 1 : i32
      %c1_i32_30 = arith.constant 1 : i32
      %63 = arith.subi %c1_i32, %c1_i32_30 : i32
      %64 = arith.addi %62, %63 : i32
      %c1_i32_31 = arith.constant 1 : i32
      %65 = arith.divsi %64, %c1_i32_31 : i32
      %c1_i32_32 = arith.constant 1 : i32
      %c0_i32_33 = arith.constant 0 : i32
      %c0_i32_34 = arith.constant 0 : i32
      %66 = arith.subi %65, %c0_i32_34 : i32
      %67 = arith.addi %c0_i32_34, %66 : i32
      %c1_i32_35 = arith.constant 1 : i32
      scf.for %arg6 = %c0_i32_34 to %67 step %c1_i32_35  : i32 {
        %68 = arith.muli %arg6, %c1_i32_32 : i32
        %69 = arith.addi %c0_i32_33, %68 : i32
        %c0_36 = arith.constant 0 : index
        %c0_37 = arith.constant 0 : index
        %70 = vector.load %arg5[%c0_36, %c0_37] : memref<128x128xf32, #tpu.memory_space<vmem>>, vector<128x128xf32>
        %cst_38 = arith.constant dense<0.000000e+00> : vector<128x128xf32>
        %71 = tpu.matmul %70, %70, %cst_38 {dimension_numbers = #tpu.dot_dimension_numbers<[1], [0], [0], [1], [0, 0, 1, 1], [], []>} : vector<128x128xf32>, vector<128x128xf32>, vector<128x128xf32> -> vector<128x128xf32>
        %c0_39 = arith.constant 0 : index
        %c0_40 = arith.constant 0 : index
        %72 = vector.load %arg5[%c0_39, %c0_40] : memref<128x128xf32, #tpu.memory_space<vmem>>, vector<128x128xf32>
        tpu.vector_store %arg5[%c0_39, %c0_40], %71 {strides = array<i32>} : memref<128x128xf32, #tpu.memory_space<vmem>>, vector<128x128xf32>,
      }
    } else {
    }
    %c0 = arith.constant 0 : index
    %c0_1 = arith.constant 0 : index
    %3 = vector.load %arg3[%c0, %c0_1] : memref<8x128xf32, #tpu.memory_space<vmem>>, vector<8x128xf32>
    %c0_2 = arith.constant 0 : index
    %c0_3 = arith.constant 0 : index
    %4 = vector.load %arg5[%c0_2, %c0_3] : memref<128x128xf32, #tpu.memory_space<vmem>>, vector<128x128xf32>
    %cst = arith.constant dense<0.000000e+00> : vector<8x128xf32>
    %5 = tpu.matmul %3, %4, %cst {dimension_numbers = #tpu.dot_dimension_numbers<[1], [0], [0], [1], [0, 0, 1, 1], [], []>} : vector<8x128xf32>, vector<128x128xf32>, vector<8x128xf32> -> vector<8x128xf32>
    %c0_4 = arith.constant 0 : index
    %c0_5 = arith.constant 0 : index
    %6 = vector.load %arg4[%c0_4, %c0_5] : memref<8x128xf32, #tpu.memory_space<vmem>>, vector<8x128xf32>
    tpu.vector_store %arg4[%c0_4, %c0_5], %5 {strides = array<i32>} : memref<8x128xf32, #tpu.memory_space<vmem>>, vector<8x128xf32>,
    return
  }
  func.func @transform_0(%arg0: i32, %arg1: memref<1xi32, #tpu.memory_space<smem>>) -> (i32, i32) {
    %c0_i32 = arith.constant 0 : i32
    %c0_i32_0 = arith.constant 0 : i32
    %c0_i32_1 = arith.constant 0 : i32
    return %c0_i32, %c0_i32_0 : i32, i32
  }
  func.func @transform_1(%arg0: i32, %arg1: memref<1xi32, #tpu.memory_space<smem>>) -> (i32, i32) {
    %c0_i32 = arith.constant 0 : i32
    %c0_i32_0 = arith.constant 0 : i32
    return %arg0, %c0_i32 : i32, i32
  }
  func.func @transform_2(%arg0: i32, %arg1: memref<1xi32, #tpu.memory_space<smem>>) -> (i32, i32) {
    %c0_i32 = arith.constant 0 : i32
    %c0_i32_0 = arith.constant 0 : i32
    return %arg0, %c0_i32 : i32, i32
  }
}

</mosaic_0001>

<llo_original>
// kernel: tpu_custom_call.1
$region0: #{tpu_custom_call.1}
  #allocation0 [shape = 'u32[]', space=smem, size = 0x4, offset = 0x4, fixed_abs, tag = 'smem constant byte address 0x4 - core index']
  #allocation1 [shape = 'u32[144,128]{1,0:T(1,128)}', space=vmem, size = 0x12000, scoped, tag = 'internal scratch']
  #allocation2 [shape = 'f32[128,128]{1,0:T(8,128)}', space=vmem, size = 0x10000, scoped, tag = 'scratch operand']
  #allocation3 [shape = 's32[1]{0}', space=sflag, size = 0x4, scoped, tag = 'scoped memory for tpu_custom_call.1']
  #allocation4 [shape = 's32[1]{0:T(128)S(6)}', space=smem, size = 0x200, scoped, tag = 'prefetched SMEM operand 0']
  %s0 = inlined_call_operand.<no memory space> [shape: s32[1], index: 0, kind: input, shape index: {}]
  %s1 = inlined_call_operand.hbm [shape: f32[128,128], index: 1, kind: input, shape index: {}]
  %s2 = inlined_call_operand.hbm [shape: f32[8,128], index: 2, kind: input, shape index: {}]
  %s3 = inlined_call_operand.hbm [shape: f32[8,128], index: 3, kind: output, shape index: {}]
  %s4 = sld [smem:[#allocation0]]
  $region37: #{tpu_custom_call.1} parent=0
    _
  %s6 = ssub.s32 1, %s4
  %s7 = scalar_select 0, %s6, %s4
  %8 = sst [smem:[#allocation4]] %s0
  $region1: #{tpu_custom_call.1} parent=0
    #allocation5 [shape = 'u8[65536]{0}', space=vmem, size = 0x10000, scoped, tag = 'input window, operand 1, single buffered']
    #allocation6 [shape = 's32[1]{0}', space=sflag, size = 0x4, scoped, tag = 'scoped memory for tpu_custom_call.1']
    #allocation7 [shape = 's32[1]{0}', space=sflag, size = 0x4, scoped, tag = 'scoped memory for tpu_custom_call.1']
    #allocation8 [shape = 'u8[4096]{0}', space=vmem, size = 0x1000, scoped, tag = 'input window, operand 2, single buffered']
    #allocation9 [shape = 's32[1]{0}', space=sflag, size = 0x4, scoped, tag = 'scoped memory for tpu_custom_call.1']
    #allocation10 [shape = 'u8[4096]{0}', space=vmem, size = 0x1000, scoped, tag = 'output window, operand 0, single buffered']
    %9 = vsyncpa [#allocation6], 0
    %10 = vsyncpa [#allocation9], 0
    %11 = vsyncpa [#allocation7], 0
    // Predicated region
    $region2: #{tpu_custom_call.1} parent=1 // pred_check
      _
    $region3: #{tpu_custom_call.1} parent=1 // pred_check_branch
      %13 = sbr.rel (0) target = $region5
    $region4: #{tpu_custom_call.1} parent=1 // pred_region
      %s15 = ssub.s32 2048, 2048
      %16 = vsyncadd [#allocation6], %s15
      %s17 = sshll.u32 [#allocation5], 4
      %s18 = int_to_ptr.vmem [resolvable:$true] %s17
      %23 = dma.hbm_to_vmem [thread:$0]  %s1, 2048, %s18, [#allocation6], 128, 128, 8
    $region5: #{tpu_custom_call.1} parent=1 // pred_fallthru
      _
    // Predicated region
    $region6: #{tpu_custom_call.1} parent=1 // pred_check
      _
    $region7: #{tpu_custom_call.1} parent=1 // pred_check_branch
      %25 = sbr.rel (0) target = $region9
    $region8: #{tpu_custom_call.1} parent=1 // pred_region
      %s27 = ssub.s32 128, 128
      %28 = vsyncadd [#allocation9], %s27
      %s30 = sshll.u32 [#allocation8], 4
      %s31 = int_to_ptr.vmem [resolvable:$true] %s30
      %33 = dma.hbm_to_vmem [thread:$0]  %s2, 128, %s31, [#allocation9]
    $region9: #{tpu_custom_call.1} parent=1 // pred_fallthru
      _
    // Predicated region
    $region10: #{tpu_custom_call.1} parent=1 // pred_check
      _
    $region11: #{tpu_custom_call.1} parent=1 // pred_check_branch
      %35 = sbr.rel (0) target = $region13
    $region12: #{tpu_custom_call.1} parent=1 // pred_region
      %36 = dma.done [#allocation6], 2048
    $region13: #{tpu_custom_call.1} parent=1 // pred_fallthru
      _
    // Predicated region
    $region14: #{tpu_custom_call.1} parent=1 // pred_check
      _
    $region15: #{tpu_custom_call.1} parent=1 // pred_check_branch
      %38 = sbr.rel (0) target = $region17
    $region16: #{tpu_custom_call.1} parent=1 // pred_region
      %39 = dma.done [#allocation9], 128
    $region17: #{tpu_custom_call.1} parent=1 // pred_fallthru
      _
    %p40 = scmp.eq.s32.totalorder 0, 0
    // Predicated region
    $region18: #{tpu_custom_call.1} parent=1 // pred_check
      %p41 = pneg %p40
    $region19: #{tpu_custom_call.1} parent=1 // pred_check_branch
      %43 = sbr.rel (%p41) target = $region21
    $region20: #{tpu_custom_call.1} parent=1 // pred_region
      %v44 = vld [vmem:[#allocation5] sm:$0xff]
      %v45 = vld [vmem:[#allocation5 + $0x8] sm:$0xff]
      %v46 = vld [vmem:[#allocation5 + $0x10] sm:$0xff]
      %v47 = vld [vmem:[#allocation5 + $0x18] sm:$0xff]
      %v48 = vld [vmem:[#allocation5 + $0x20] sm:$0xff]
      %v49 = vld [vmem:[#allocation5 + $0x28] sm:$0xff]
      %v50 = vld [vmem:[#allocation5 + $0x30] sm:$0xff]
      %v51 = vld [vmem:[#allocation5 + $0x38] sm:$0xff]
      %v52 = vld [vmem:[#allocation5 + $0x40] sm:$0xff]
      %v53 = vld [vmem:[#allocation5 + $0x48] sm:$0xff]
      %v54 = vld [vmem:[#allocation5 + $0x50] sm:$0xff]
      %v55 = vld [vmem:[#allocation5 + $0x58] sm:$0xff]
      %v56 = vld [vmem:[#allocation5 + $0x60] sm:$0xff]
      %v57 = vld [vmem:[#allocation5 + $0x68] sm:$0xff]
      %v58 = vld [vmem:[#allocation5 + $0x70] sm:$0xff]
      %v59 = vld [vmem:[#allocation5 + $0x78] sm:$0xff]
      %v60 = vlaneseq
      %v61 = vshrl.u32 %v60, 7
      %v62 = vadd.s32 %v61, 8
      %v63 = vadd.s32 %v61, 16
      %v64 = vadd.s32 %v61, 24
      %v65 = vadd.s32 %v61, 32
      %v66 = vadd.s32 %v61, 40
      %v67 = vadd.s32 %v61, 48
      %v68 = vadd.s32 %v61, 56
      %v69 = vadd.s32 %v61, 64
      %v70 = vadd.s32 %v61, 72
      %v71 = vadd.s32 %v61, 80
      %v72 = vadd.s32 %v61, 88
      %v73 = vadd.s32 %v61, 96
      %v74 = vadd.s32 %v61, 104
      %v75 = vadd.s32 %v61, 112
      %v76 = vadd.s32 %v61, 120
      %v77 = vlaneseq
      %v78 = vand.u32 %v77, 127
      %vm79 = vcmp.ge.s32.totalorder %v78, %v61
      %vm80 = vcmp.ge.s32.totalorder %v78, %v62
      %vm81 = vcmp.ge.s32.totalorder %v78, %v63
      %vm82 = vcmp.ge.s32.totalorder %v78, %v64
      %vm83 = vcmp.ge.s32.totalorder %v78, %v65
      %vm84 = vcmp.ge.s32.totalorder %v78, %v66
      %vm85 = vcmp.ge.s32.totalorder %v78, %v67
      %vm86 = vcmp.ge.s32.totalorder %v78, %v68
      %vm87 = vcmp.ge.s32.totalorder %v78, %v69
      %vm88 = vcmp.ge.s32.totalorder %v78, %v70
      %vm89 = vcmp.ge.s32.totalorder %v78, %v71
      %vm90 = vcmp.ge.s32.totalorder %v78, %v72
      %vm91 = vcmp.ge.s32.totalorder %v78, %v73
      %vm92 = vcmp.ge.s32.totalorder %v78, %v74
      %vm93 = vcmp.ge.s32.totalorder %v78, %v75
      %vm94 = vcmp.ge.s32.totalorder %v78, %v76
      %95 = vxpose.xlu0.b32.start [1/16] %v44, 128
      %96 = vxpose.xlu0.b32.cont [2/16] %v45, 128
      %97 = vxpose.xlu0.b32.cont [3/16] %v46, 128
      %98 = vxpose.xlu0.b32.cont [4/16] %v47, 128
      %99 = vxpose.xlu0.b32.cont [5/16] %v48, 128
      %100 = vxpose.xlu0.b32.cont [6/16] %v49, 128
      %101 = vxpose.xlu0.b32.cont [7/16] %v50, 128
      %102 = vxpose.xlu0.b32.cont [8/16] %v51, 128
      %103 = vxpose.xlu0.b32.cont [9/16] %v52, 128
      %104 = vxpose.xlu0.b32.cont [10/16] %v53, 128
      %105 = vxpose.xlu0.b32.cont [11/16] %v54, 128
      %106 = vxpose.xlu0.b32.cont [12/16] %v55, 128
      %107 = vxpose.xlu0.b32.cont [13/16] %v56, 128
      %108 = vxpose.xlu0.b32.cont [14/16] %v57, 128
      %109 = vxpose.xlu0.b32.cont [15/16] %v58, 128
      %110 = vxpose.xlu0.b32.end [16/16] %v59, 128
      %v111 = vpop.trf.xlu0
      %v112 = vpop.trf.xlu0
      %v113 = vpop.trf.xlu0
      %v114 = vpop.trf.xlu0
      %v115 = vpop.trf.xlu0
      %v116 = vpop.trf.xlu0
      %v117 = vpop.trf.xlu0
      %v118 = vpop.trf.xlu0
      %v119 = vpop.trf.xlu0
      %v120 = vpop.trf.xlu0
      %v121 = vpop.trf.xlu0
      %v122 = vpop.trf.xlu0
      %v123 = vpop.trf.xlu0
      %v124 = vpop.trf.xlu0
      %v125 = vpop.trf.xlu0
      %v126 = vpop.trf.xlu0
      %v127 = vsel %vm79, %v44, %v111
      %v128 = vsel %vm80, %v45, %v112
      %v129 = vsel %vm81, %v46, %v113
      %v130 = vsel %vm82, %v47, %v114
      %v131 = vsel %vm83, %v48, %v115
      %v132 = vsel %vm84, %v49, %v116
      %v133 = vsel %vm85, %v50, %v117
      %v134 = vsel %vm86, %v51, %v118
      %v135 = vsel %vm87, %v52, %v119
      %v136 = vsel %vm88, %v53, %v120
      %v137 = vsel %vm89, %v54, %v121
      %v138 = vsel %vm90, %v55, %v122
      %v139 = vsel %vm91, %v56, %v123
      %v140 = vsel %vm92, %v57, %v124
      %v141 = vsel %vm93, %v58, %v125
      %v142 = vsel %vm94, %v59, %v126
      %vm143 = vcmp.eq.s32.totalorder %v61, %v78
      %vm144 = vcmp.eq.s32.totalorder %v62, %v78
      %vm145 = vcmp.eq.s32.totalorder %v63, %v78
      %vm146 = vcmp.eq.s32.totalorder %v64, %v78
      %vm147 = vcmp.eq.s32.totalorder %v65, %v78
      %vm148 = vcmp.eq.s32.totalorder %v66, %v78
      %vm149 = vcmp.eq.s32.totalorder %v67, %v78
      %vm150 = vcmp.eq.s32.totalorder %v68, %v78
      %vm151 = vcmp.eq.s32.totalorder %v69, %v78
      %vm152 = vcmp.eq.s32.totalorder %v70, %v78
      %vm153 = vcmp.eq.s32.totalorder %v71, %v78
      %vm154 = vcmp.eq.s32.totalorder %v72, %v78
      %vm155 = vcmp.eq.s32.totalorder %v73, %v78
      %vm156 = vcmp.eq.s32.totalorder %v74, %v78
      %vm157 = vcmp.eq.s32.totalorder %v75, %v78
      %vm158 = vcmp.eq.s32.totalorder %v76, %v78
      %v159 = vsel %vm143, 1, 0
      %v160 = vsel %vm144, 1, 0
      %v161 = vsel %vm145, 1, 0
      %v162 = vsel %vm146, 1, 0
      %v163 = vsel %vm147, 1, 0
      %v164 = vsel %vm148, 1, 0
      %v165 = vsel %vm149, 1, 0
      %v166 = vsel %vm150, 1, 0
      %v167 = vsel %vm151, 1, 0
      %v168 = vsel %vm152, 1, 0
      %v169 = vsel %vm153, 1, 0
      %v170 = vsel %vm154, 1, 0
      %v171 = vsel %vm155, 1, 0
      %v172 = vsel %vm156, 1, 0
      %v173 = vsel %vm157, 1, 0
      %v174 = vsel %vm158, 1, 0
      %v175 = vcvt.s32.f32 %v159
      %v176 = vcvt.s32.f32 %v160
      %v177 = vcvt.s32.f32 %v161
      %v178 = vcvt.s32.f32 %v162
      %v179 = vcvt.s32.f32 %v163
      %v180 = vcvt.s32.f32 %v164
      %v181 = vcvt.s32.f32 %v165
      %v182 = vcvt.s32.f32 %v166
      %v183 = vcvt.s32.f32 %v167
      %v184 = vcvt.s32.f32 %v168
      %v185 = vcvt.s32.f32 %v169
      %v186 = vcvt.s32.f32 %v170
      %v187 = vcvt.s32.f32 %v171
      %v188 = vcvt.s32.f32 %v172
      %v189 = vcvt.s32.f32 %v173
      %v190 = vcvt.s32.f32 %v174
      %191 = vmatprep.subr.mxu0 0.0
      %192 = vmatpush1.msra.mxu0 %v127
      %193 = vmatprep.subr.mxu0 0.0
      %194 = vmatpush1.msra.mxu0 %v128
      %195 = vmatprep.subr.mxu0 0.0
      %196 = vmatpush1.msra.mxu0 %v129
      %197 = vmatprep.subr.mxu0 0.0
      %198 = vmatpush1.msra.mxu0 %v130
      %199 = vmatprep.subr.mxu0 0.0
      %200 = vmatpush1.msra.mxu0 %v131
      %201 = vmatprep.subr.mxu0 0.0
      %202 = vmatpush1.msra.mxu0 %v132
      %203 = vmatprep.subr.mxu0 0.0
      %204 = vmatpush1.msra.mxu0 %v133
      %205 = vmatprep.subr.mxu0 0.0
      %206 = vmatpush1.msra.mxu0 %v134
      %207 = vmatprep.subr.mxu0 0.0
      %208 = vmatpush1.msra.mxu0 %v135
      %209 = vmatprep.subr.mxu0 0.0
      %210 = vmatpush1.msra.mxu0 %v136
      %211 = vmatprep.subr.mxu0 0.0
      %212 = vmatpush1.msra.mxu0 %v137
      %213 = vmatprep.subr.mxu0 0.0
      %214 = vmatpush1.msra.mxu0 %v138
      %215 = vmatprep.subr.mxu0 0.0
      %216 = vmatpush1.msra.mxu0 %v139
      %217 = vmatprep.subr.mxu0 0.0
      %218 = vmatpush1.msra.mxu0 %v140
      %219 = vmatprep.subr.mxu0 0.0
      %220 = vmatpush1.msra.mxu0 %v141
      %221 = vmatprep.subr.mxu0 0.0
      %222 = vmatpush1.msra.mxu0 %v142
      %223 = vmatprep.subr.mxu0 0.0
      %224 = vmatpush1.msra.mxu0 0.0
      %225 = vmatprep.subr.mxu0 0.0
      %226 = vmatpush1.msra.mxu0 0.0
      %227 = vmatprep.subr.mxu0 0.0
      %228 = vmatpush1.msra.mxu0 0.0
      %229 = vmatprep.subr.mxu0 0.0
      %230 = vmatpush1.msra.mxu0 0.0
      %231 = vmatprep.subr.mxu0 0.0
      %232 = vmatpush1.msra.mxu0 0.0
      %233 = vmatprep.subr.mxu0 0.0
      %234 = vmatpush1.msra.mxu0 0.0
      %235 = vmatprep.subr.mxu0 0.0
      %236 = vmatpush1.msra.mxu0 0.0
      %237 = vmatprep.subr.mxu0 0.0
      %238 = vmatpush1.msra.mxu0 0.0
      %239 = vmatprep.subr.mxu0 0.0
      %240 = vmatpush1.msra.mxu0 0.0
      %241 = vmatprep.subr.mxu0 0.0
      %242 = vmatpush1.msra.mxu0 0.0
      %243 = vmatprep.subr.mxu0 0.0
      %244 = vmatpush1.msra.mxu0 0.0
      %245 = vmatprep.subr.mxu0 0.0
      %246 = vmatpush1.msra.mxu0 0.0
      %247 = vmatprep.subr.mxu0 0.0
      %248 = vmatpush1.msra.mxu0 0.0
      %249 = vmatprep.subr.mxu0 0.0
      %250 = vmatpush1.msra.mxu0 0.0
      %251 = vmatprep.subr.mxu0 0.0
      %252 = vmatpush1.msra.mxu0 0.0
      %253 = vmatprep.subr.mxu0 0.0
      %254 = vmatpush1.msra.mxu0 0.0
      %255 = vmatprep.mubr.f32.mxu0 0.0
      %256 = vmatmul.mubr.f32.gmra.mrb[0].mxu0 %v127
      %v257 = vpop.f32.mrb[0].mxu0
      %v258 = vadd.f32 0.0, %v257
      %v259 = vpop.f32.mrb[0].mxu0
      %260 = vmatprep.mubr.f32.mxu0 0.0
      %261 = vmatmul.mubr.f32.gmra.mrb[0].mxu0 %v128
      %v262 = vpop.f32.mrb[0].mxu0
      %v263 = vadd.f32 0.0, %v262
      %v264 = vpop.f32.mrb[0].mxu0
      %265 = vmatprep.mubr.f32.mxu0 0.0
      %266 = vmatmul.mubr.f32.gmra.mrb[0].mxu0 %v129
      %v267 = vpop.f32.mrb[0].mxu0
      %v268 = vadd.f32 0.0, %v267
      %v269 = vpop.f32.mrb[0].mxu0
      %270 = vmatprep.mubr.f32.mxu0 0.0
      %271 = vmatmul.mubr.f32.gmra.mrb[0].mxu0 %v130
      %v272 = vpop.f32.mrb[0].mxu0
      %v273 = vadd.f32 0.0, %v272
      %v274 = vpop.f32.mrb[0].mxu0
      %275 = vmatprep.mubr.f32.mxu0 0.0
      %276 = vmatmul.mubr.f32.gmra.mrb[0].mxu0 %v131
      %v277 = vpop.f32.mrb[0].mxu0
      %v278 = vadd.f32 0.0, %v277
      %v279 = vpop.f32.mrb[0].mxu0
      %280 = vmatprep.mubr.f32.mxu0 0.0
      %281 = vmatmul.mubr.f32.gmra.mrb[0].mxu0 %v132
      %v282 = vpop.f32.mrb[0].mxu0
      %v283 = vadd.f32 0.0, %v282
      %v284 = vpop.f32.mrb[0].mxu0
      %285 = vmatprep.mubr.f32.mxu0 0.0
      %286 = vmatmul.mubr.f32.gmra.mrb[0].mxu0 %v133
      %v287 = vpop.f32.mrb[0].mxu0
      %v288 = vadd.f32 0.0, %v287
      %v289 = vpop.f32.mrb[0].mxu0
      %290 = vmatprep.mubr.f32.mxu0 0.0
      %291 = vmatmul.mubr.f32.gmra.mrb[0].mxu0 %v134
      %v292 = vpop.f32.mrb[0].mxu0
      %v293 = vadd.f32 0.0, %v292
      %v294 = vpop.f32.mrb[0].mxu0
      %295 = vmatprep.mubr.f32.mxu0 0.0
      %296 = vmatmul.mubr.f32.gmra.mrb[0].mxu0 %v135
      %v297 = vpop.f32.mrb[0].mxu0
      %v298 = vadd.f32 0.0, %v297
      %v299 = vpop.f32.mrb[0].mxu0
      %300 = vmatprep.mubr.f32.mxu0 0.0
      %301 = vmatmul.mubr.f32.gmra.mrb[0].mxu0 %v136
      %v302 = vpop.f32.mrb[0].mxu0
      %v303 = vadd.f32 0.0, %v302
      %v304 = vpop.f32.mrb[0].mxu0
      %305 = vmatprep.mubr.f32.mxu0 0.0
      %306 = vmatmul.mubr.f32.gmra.mrb[0].mxu0 %v137
      %v307 = vpop.f32.mrb[0].mxu0
      %v308 = vadd.f32 0.0, %v307
      %v309 = vpop.f32.mrb[0].mxu0
      %310 = vmatprep.mubr.f32.mxu0 0.0
      %311 = vmatmul.mubr.f32.gmra.mrb[0].mxu0 %v138
      %v312 = vpop.f32.mrb[0].mxu0
      %v313 = vadd.f32 0.0, %v312
      %v314 = vpop.f32.mrb[0].mxu0
      %315 = vmatprep.mubr.f32.mxu0 0.0
      %316 = vmatmul.mubr.f32.gmra.mrb[0].mxu0 %v139
      %v317 = vpop.f32.mrb[0].mxu0
      %v318 = vadd.f32 0.0, %v317
      %v319 = vpop.f32.mrb[0].mxu0
      %320 = vmatprep.mubr.f32.mxu0 0.0
      %321 = vmatmul.mubr.f32.gmra.mrb[0].mxu0 %v140
      %v322 = vpop.f32.mrb[0].mxu0
      %v323 = vadd.f32 0.0, %v322
      %v324 = vpop.f32.mrb[0].mxu0
      %325 = vmatprep.mubr.f32.mxu0 0.0
      %326 = vmatmul.mubr.f32.gmra.mrb[0].mxu0 %v141
      %v327 = vpop.f32.mrb[0].mxu0
      %v328 = vadd.f32 0.0, %v327
      %v329 = vpop.f32.mrb[0].mxu0
      %330 = vmatprep.mubr.f32.mxu0 0.0
      %331 = vmatmul.mubr.f32.gmra.mrb[0].mxu0 %v142
      %v332 = vpop.f32.mrb[0].mxu0
      %v333 = vadd.f32 0.0, %v332
      %v334 = vpop.f32.mrb[0].mxu0
      %335 = vdwg.mxu0
      %336 = vmatprep.subr.mxu0 0.0
      %337 = vmatpush1.msra.mxu0 %v127
      %338 = vmatprep.subr.mxu0 0.0
      %339 = vmatpush1.msra.mxu0 %v128
      %340 = vmatprep.subr.mxu0 0.0
      %341 = vmatpush1.msra.mxu0 %v129
      %342 = vmatprep.subr.mxu0 0.0
      %343 = vmatpush1.msra.mxu0 %v130
      %344 = vmatprep.subr.mxu0 0.0
      %345 = vmatpush1.msra.mxu0 %v131
      %346 = vmatprep.subr.mxu0 0.0
      %347 = vmatpush1.msra.mxu0 %v132
      %348 = vmatprep.subr.mxu0 0.0
      %349 = vmatpush1.msra.mxu0 %v133
      %350 = vmatprep.subr.mxu0 0.0
      %351 = vmatpush1.msra.mxu0 %v134
      %352 = vmatprep.subr.mxu0 0.0
      %353 = vmatpush1.msra.mxu0 %v135
      %354 = vmatprep.subr.mxu0 0.0
      %355 = vmatpush1.msra.mxu0 %v136
      %356 = vmatprep.subr.mxu0 0.0
      %357 = vmatpush1.msra.mxu0 %v137
      %358 = vmatprep.subr.mxu0 0.0
      %359 = vmatpush1.msra.mxu0 %v138
      %360 = vmatprep.subr.mxu0 0.0
      %361 = vmatpush1.msra.mxu0 %v139
      %362 = vmatprep.subr.mxu0 0.0
      %363 = vmatpush1.msra.mxu0 %v140
      %364 = vmatprep.subr.mxu0 0.0
      %365 = vmatpush1.msra.mxu0 %v141
      %366 = vmatprep.subr.mxu0 0.0
      %367 = vmatpush1.msra.mxu0 %v142
      %368 = vmatprep.subr.mxu0 0.0
      %369 = vmatpush1.msra.mxu0 0.0
      %370 = vmatprep.subr.mxu0 0.0
      %371 = vmatpush1.msra.mxu0 0.0
      %372 = vmatprep.subr.mxu0 0.0
      %373 = vmatpush1.msra.mxu0 0.0
      %374 = vmatprep.subr.mxu0 0.0
      %375 = vmatpush1.msra.mxu0 0.0
      %376 = vmatprep.subr.mxu0 0.0
      %377 = vmatpush1.msra.mxu0 0.0
      %378 = vmatprep.subr.mxu0 0.0
      %379 = vmatpush1.msra.mxu0 0.0
      %380 = vmatprep.subr.mxu0 0.0
      %381 = vmatpush1.msra.mxu0 0.0
      %382 = vmatprep.subr.mxu0 0.0
      %383 = vmatpush1.msra.mxu0 0.0
      %384 = vmatprep.subr.mxu0 0.0
      %385 = vmatpush1.msra.mxu0 0.0
      %386 = vmatprep.subr.mxu0 0.0
      %387 = vmatpush1.msra.mxu0 0.0
      %388 = vmatprep.subr.mxu0 0.0
      %389 = vmatpush1.msra.mxu0 0.0
      %390 = vmatprep.subr.mxu0 0.0
      %391 = vmatpush1.msra.mxu0 0.0
      %392 = vmatprep.subr.mxu0 0.0
      %393 = vmatpush1.msra.mxu0 0.0
      %394 = vmatprep.subr.mxu0 0.0
      %395 = vmatpush1.msra.mxu0 0.0
      %396 = vmatprep.subr.mxu0 0.0
      %397 = vmatpush1.msra.mxu0 0.0
      %398 = vmatprep.subr.mxu0 0.0
      %399 = vmatpush1.msra.mxu0 0.0
      %400 = vmatprep.mubr.f32.mxu0 0.0
      %401 = vmatmul.mubr.f32.gmra.mrb[0].mxu0 %v258
      %v402 = vpop.f32.mrb[0].mxu0
      %v403 = vadd.f32 0.0, %v402
      %v404 = vpop.f32.mrb[0].mxu0
      %405 = vmatprep.mubr.f32.mxu0 0.0
      %406 = vmatmul.mubr.f32.gmra.mrb[0].mxu0 %v263
      %v407 = vpop.f32.mrb[0].mxu0
      %v408 = vadd.f32 0.0, %v407
      %v409 = vpop.f32.mrb[0].mxu0
      %410 = vmatprep.mubr.f32.mxu0 0.0
      %411 = vmatmul.mubr.f32.gmra.mrb[0].mxu0 %v268
      %v412 = vpop.f32.mrb[0].mxu0
      %v413 = vadd.f32 0.0, %v412
      %v414 = vpop.f32.mrb[0].mxu0
      %415 = vmatprep.mubr.f32.mxu0 0.0
      %416 = vmatmul.mubr.f32.gmra.mrb[0].mxu0 %v273
      %v417 = vpop.f32.mrb[0].mxu0
      %v418 = vadd.f32 0.0, %v417
      %v419 = vpop.f32.mrb[0].mxu0
      %420 = vmatprep.mubr.f32.mxu0 0.0
      %421 = vmatmul.mubr.f32.gmra.mrb[0].mxu0 %v278
      %v422 = vpop.f32.mrb[0].mxu0
      %v423 = vadd.f32 0.0, %v422
      %v424 = vpop.f32.mrb[0].mxu0
      %425 = vmatprep.mubr.f32.mxu0 0.0
      %426 = vmatmul.mubr.f32.gmra.mrb[0].mxu0 %v283
      %v427 = vpop.f32.mrb[0].mxu0
      %v428 = vadd.f32 0.0, %v427
      %v429 = vpop.f32.mrb[0].mxu0
      %430 = vmatprep.mubr.f32.mxu0 0.0
      %431 = vmatmul.mubr.f32.gmra.mrb[0].mxu0 %v288
      %v432 = vpop.f32.mrb[0].mxu0
      %v433 = vadd.f32 0.0, %v432
      %v434 = vpop.f32.mrb[0].mxu0
      %435 = vmatprep.mubr.f32.mxu0 0.0
      %436 = vmatmul.mubr.f32.gmra.mrb[0].mxu0 %v293
      %v437 = vpop.f32.mrb[0].mxu0
      %v438 = vadd.f32 0.0, %v437
      %v439 = vpop.f32.mrb[0].mxu0
      %440 = vmatprep.mubr.f32.mxu0 0.0
      %441 = vmatmul.mubr.f32.gmra.mrb[0].mxu0 %v298
      %v442 = vpop.f32.mrb[0].mxu0
      %v443 = vadd.f32 0.0, %v442
      %v444 = vpop.f32.mrb[0].mxu0
      %445 = vmatprep.mubr.f32.mxu0 0.0
      %446 = vmatmul.mubr.f32.gmra.mrb[0].mxu0 %v303
      %v447 = vpop.f32.mrb[0].mxu0
      %v448 = vadd.f32 0.0, %v447
      %v449 = vpop.f32.mrb[0].mxu0
      %450 = vmatprep.mubr.f32.mxu0 0.0
      %451 = vmatmul.mubr.f32.gmra.mrb[0].mxu0 %v308
      %v452 = vpop.f32.mrb[0].mxu0
      %v453 = vadd.f32 0.0, %v452
      %v454 = vpop.f32.mrb[0].mxu0
      %455 = vmatprep.mubr.f32.mxu0 0.0
      %456 = vmatmul.mubr.f32.gmra.mrb[0].mxu0 %v313
      %v457 = vpop.f32.mrb[0].mxu0
      %v458 = vadd.f32 0.0, %v457
      %v459 = vpop.f32.mrb[0].mxu0
      %460 = vmatprep.mubr.f32.mxu0 0.0
      %461 = vmatmul.mubr.f32.gmra.mrb[0].mxu0 %v318
      %v462 = vpop.f32.mrb[0].mxu0
      %v463 = vadd.f32 0.0, %v462
      %v464 = vpop.f32.mrb[0].mxu0
      %465 = vmatprep.mubr.f32.mxu0 0.0
      %466 = vmatmul.mubr.f32.gmra.mrb[0].mxu0 %v323
      %v467 = vpop.f32.mrb[0].mxu0
      %v468 = vadd.f32 0.0, %v467
      %v469 = vpop.f32.mrb[0].mxu0
      %470 = vmatprep.mubr.f32.mxu0 0.0
      %471 = vmatmul.mubr.f32.gmra.mrb[0].mxu0 %v328
      %v472 = vpop.f32.mrb[0].mxu0
      %v473 = vadd.f32 0.0, %v472
      %v474 = vpop.f32.mrb[0].mxu0
      %475 = vmatprep.mubr.f32.mxu0 0.0
      %476 = vmatmul.mubr.f32.gmra.mrb[0].mxu0 %v333
      %v477 = vpop.f32.mrb[0].mxu0
      %v478 = vadd.f32 0.0, %v477
      %v479 = vpop.f32.mrb[0].mxu0
      %480 = vdwg.mxu0
      %481 = vmatprep.subr.mxu0 0.0
      %482 = vmatpush1.msra.mxu0 %v258
      %483 = vmatprep.subr.mxu0 0.0
      %484 = vmatpush1.msra.mxu0 %v263
      %485 = vmatprep.subr.mxu0 0.0
      %486 = vmatpush1.msra.mxu0 %v268
      %487 = vmatprep.subr.mxu0 0.0
      %488 = vmatpush1.msra.mxu0 %v273
      %489 = vmatprep.subr.mxu0 0.0
      %490 = vmatpush1.msra.mxu0 %v278
      %491 = vmatprep.subr.mxu0 0.0
      %492 = vmatpush1.msra.mxu0 %v283
      %493 = vmatprep.subr.mxu0 0.0
      %494 = vmatpush1.msra.mxu0 %v288
      %495 = vmatprep.subr.mxu0 0.0
      %496 = vmatpush1.msra.mxu0 %v293
      %497 = vmatprep.subr.mxu0 0.0
      %498 = vmatpush1.msra.mxu0 %v298
      %499 = vmatprep.subr.mxu0 0.0
      %500 = vmatpush1.msra.mxu0 %v303
      %501 = vmatprep.subr.mxu0 0.0
      %502 = vmatpush1.msra.mxu0 %v308
      %503 = vmatprep.subr.mxu0 0.0
      %504 = vmatpush1.msra.mxu0 %v313
      %505 = vmatprep.subr.mxu0 0.0
      %506 = vmatpush1.msra.mxu0 %v318
      %507 = vmatprep.subr.mxu0 0.0
      %508 = vmatpush1.msra.mxu0 %v323
      %509 = vmatprep.subr.mxu0 0.0
      %510 = vmatpush1.msra.mxu0 %v328
      %511 = vmatprep.subr.mxu0 0.0
      %512 = vmatpush1.msra.mxu0 %v333
      %513 = vmatprep.subr.mxu0 0.0
      %514 = vmatpush1.msra.mxu0 0.0
      %515 = vmatprep.subr.mxu0 0.0
      %516 = vmatpush1.msra.mxu0 0.0
      %517 = vmatprep.subr.mxu0 0.0
      %518 = vmatpush1.msra.mxu0 0.0
      %519 = vmatprep.subr.mxu0 0.0
      %520 = vmatpush1.msra.mxu0 0.0
      %521 = vmatprep.subr.mxu0 0.0
      %522 = vmatpush1.msra.mxu0 0.0
      %523 = vmatprep.subr.mxu0 0.0
      %524 = vmatpush1.msra.mxu0 0.0
      %525 = vmatprep.subr.mxu0 0.0
      %526 = vmatpush1.msra.mxu0 0.0
      %527 = vmatprep.subr.mxu0 0.0
      %528 = vmatpush1.msra.mxu0 0.0
      %529 = vmatprep.subr.mxu0 0.0
      %530 = vmatpush1.msra.mxu0 0.0
      %531 = vmatprep.subr.mxu0 0.0
      %532 = vmatpush1.msra.mxu0 0.0
      %533 = vmatprep.subr.mxu0 0.0
      %534 = vmatpush1.msra.mxu0 0.0
      %535 = vmatprep.subr.mxu0 0.0
      %536 = vmatpush1.msra.mxu0 0.0
      %537 = vmatprep.subr.mxu0 0.0
      %538 = vmatpush1.msra.mxu0 0.0
      %539 = vmatprep.subr.mxu0 0.0
      %540 = vmatpush1.msra.mxu0 0.0
      %541 = vmatprep.subr.mxu0 0.0
      %542 = vmatpush1.msra.mxu0 0.0
      %543 = vmatprep.subr.mxu0 0.0
      %544 = vmatpush1.msra.mxu0 0.0
      %545 = vmatprep.mubr.f32.mxu0 0.0
      %546 = vmatmul.mubr.f32.gmra.mrb[0].mxu0 %v258
      %v547 = vpop.f32.mrb[0].mxu0
      %v548 = vadd.f32 0.0, %v547
      %v549 = vpop.f32.mrb[0].mxu0
      %550 = vmatprep.mubr.f32.mxu0 0.0
      %551 = vmatmul.mubr.f32.gmra.mrb[0].mxu0 %v263
      %v552 = vpop.f32.mrb[0].mxu0
      %v553 = vadd.f32 0.0, %v552
      %v554 = vpop.f32.mrb[0].mxu0
      %555 = vmatprep.mubr.f32.mxu0 0.0
      %556 = vmatmul.mubr.f32.gmra.mrb[0].mxu0 %v268
      %v557 = vpop.f32.mrb[0].mxu0
      %v558 = vadd.f32 0.0, %v557
      %v559 = vpop.f32.mrb[0].mxu0
      %560 = vmatprep.mubr.f32.mxu0 0.0
      %561 = vmatmul.mubr.f32.gmra.mrb[0].mxu0 %v273
      %v562 = vpop.f32.mrb[0].mxu0
      %v563 = vadd.f32 0.0, %v562
      %v564 = vpop.f32.mrb[0].mxu0
      %565 = vmatprep.mubr.f32.mxu0 0.0
      %566 = vmatmul.mubr.f32.gmra.mrb[0].mxu0 %v278
      %v567 = vpop.f32.mrb[0].mxu0
      %v568 = vadd.f32 0.0, %v567
      %v569 = vpop.f32.mrb[0].mxu0
      %570 = vmatprep.mubr.f32.mxu0 0.0
      %571 = vmatmul.mubr.f32.gmra.mrb[0].mxu0 %v283
      %v572 = vpop.f32.mrb[0].mxu0
      %v573 = vadd.f32 0.0, %v572
      %v574 = vpop.f32.mrb[0].mxu0
      %575 = vmatprep.mubr.f32.mxu0 0.0
      %576 = vmatmul.mubr.f32.gmra.mrb[0].mxu0 %v288
      %v577 = vpop.f32.mrb[0].mxu0
      %v578 = vadd.f32 0.0, %v577
      %v579 = vpop.f32.mrb[0].mxu0
      %580 = vmatprep.mubr.f32.mxu0 0.0
      %581 = vmatmul.mubr.f32.gmra.mrb[0].mxu0 %v293
      %v582 = vpop.f32.mrb[0].mxu0
      %v583 = vadd.f32 0.0, %v582
      %v584 = vpop.f32.mrb[0].mxu0
      %585 = vmatprep.mubr.f32.mxu0 0.0
      %586 = vmatmul.mubr.f32.gmra.mrb[0].mxu0 %v298
      %v587 = vpop.f32.mrb[0].mxu0
      %v588 = vadd.f32 0.0, %v587
      %v589 = vpop.f32.mrb[0].mxu0
      %590 = vmatprep.mubr.f32.mxu0 0.0
      %591 = vmatmul.mubr.f32.gmra.mrb[0].mxu0 %v303
      %v592 = vpop.f32.mrb[0].mxu0
      %v593 = vadd.f32 0.0, %v592
      %v594 = vpop.f32.mrb[0].mxu0
      %595 = vmatprep.mubr.f32.mxu0 0.0
      %596 = vmatmul.mubr.f32.gmra.mrb[0].mxu0 %v308
      %v597 = vpop.f32.mrb[0].mxu0
      %v598 = vadd.f32 0.0, %v597
      %v599 = vpop.f32.mrb[0].mxu0
      %600 = vmatprep.mubr.f32.mxu0 0.0
      %601 = vmatmul.mubr.f32.gmra.mrb[0].mxu0 %v313
      %v602 = vpop.f32.mrb[0].mxu0
      %v603 = vadd.f32 0.0, %v602
      %v604 = vpop.f32.mrb[0].mxu0
      %605 = vmatprep.mubr.f32.mxu0 0.0
      %606 = vmatmul.mubr.f32.gmra.mrb[0].mxu0 %v318
      %v607 = vpop.f32.mrb[0].mxu0
      %v608 = vadd.f32 0.0, %v607
      %v609 = vpop.f32.mrb[0].mxu0
      %610 = vmatprep.mubr.f32.mxu0 0.0
      %611 = vmatmul.mubr.f32.gmra.mrb[0].mxu0 %v323
      %v612 = vpop.f32.mrb[0].mxu0
      %v613 = vadd.f32 0.0, %v612
      %v614 = vpop.f32.mrb[0].mxu0
      %615 = vmatprep.mubr.f32.mxu0 0.0
      %616 = vmatmul.mubr.f32.gmra.mrb[0].mxu0 %v328
      %v617 = vpop.f32.mrb[0].mxu0
      %v618 = vadd.f32 0.0, %v617
      %v619 = vpop.f32.mrb[0].mxu0
      %620 = vmatprep.mubr.f32.mxu0 0.0
      %621 = vmatmul.mubr.f32.gmra.mrb[0].mxu0 %v333
      %v622 = vpop.f32.mrb[0].mxu0
      %v623 = vadd.f32 0.0, %v622
      %v624 = vpop.f32.mrb[0].mxu0
      %625 = vdwg.mxu0
      %v626 = vadd.f32 %v175, %v127
      %v627 = vadd.f32 %v176, %v128
      %v628 = vadd.f32 %v177, %v129
      %v629 = vadd.f32 %v178, %v130
      %v630 = vadd.f32 %v179, %v131
      %v631 = vadd.f32 %v180, %v132
      %v632 = vadd.f32 %v181, %v133
      %v633 = vadd.f32 %v182, %v134
      %v634 = vadd.f32 %v183, %v135
      %v635 = vadd.f32 %v184, %v136
      %v636 = vadd.f32 %v185, %v137
      %v637 = vadd.f32 %v186, %v138
      %v638 = vadd.f32 %v187, %v139
      %v639 = vadd.f32 %v188, %v140
      %v640 = vadd.f32 %v189, %v141
      %v641 = vadd.f32 %v190, %v142
      %v642 = vmul.f32 %v258, 0.5
      %v643 = vmul.f32 %v263, 0.5
      %v644 = vmul.f32 %v268, 0.5
      %v645 = vmul.f32 %v273, 0.5
      %v646 = vmul.f32 %v278, 0.5
      %v647 = vmul.f32 %v283, 0.5
      %v648 = vmul.f32 %v288, 0.5
      %v649 = vmul.f32 %v293, 0.5
      %v650 = vmul.f32 %v298, 0.5
      %v651 = vmul.f32 %v303, 0.5
      %v652 = vmul.f32 %v308, 0.5
      %v653 = vmul.f32 %v313, 0.5
      %v654 = vmul.f32 %v318, 0.5
      %v655 = vmul.f32 %v323, 0.5
      %v656 = vmul.f32 %v328, 0.5
      %v657 = vmul.f32 %v333, 0.5
      %v658 = vadd.f32 %v626, %v642
      %v659 = vadd.f32 %v627, %v643
      %v660 = vadd.f32 %v628, %v644
      %v661 = vadd.f32 %v629, %v645
      %v662 = vadd.f32 %v630, %v646
      %v663 = vadd.f32 %v631, %v647
      %v664 = vadd.f32 %v632, %v648
      %v665 = vadd.f32 %v633, %v649
      %v666 = vadd.f32 %v634, %v650
      %v667 = vadd.f32 %v635, %v651
      %v668 = vadd.f32 %v636, %v652
      %v669 = vadd.f32 %v637, %v653
      %v670 = vadd.f32 %v638, %v654
      %v671 = vadd.f32 %v639, %v655
      %v672 = vadd.f32 %v640, %v656
      %v673 = vadd.f32 %v641, %v657
      %v674 = vmul.f32 %v403, 0.16666667
      %v675 = vmul.f32 %v408, 0.16666667
      %v676 = vmul.f32 %v413, 0.16666667
      %v677 = vmul.f32 %v418, 0.16666667
      %v678 = vmul.f32 %v423, 0.16666667
      %v679 = vmul.f32 %v428, 0.16666667
      %v680 = vmul.f32 %v433, 0.16666667
      %v681 = vmul.f32 %v438, 0.16666667
      %v682 = vmul.f32 %v443, 0.16666667
      %v683 = vmul.f32 %v448, 0.16666667
      %v684 = vmul.f32 %v453, 0.16666667
      %v685 = vmul.f32 %v458, 0.16666667
      %v686 = vmul.f32 %v463, 0.16666667
      %v687 = vmul.f32 %v468, 0.16666667
      %v688 = vmul.f32 %v473, 0.16666667
      %v689 = vmul.f32 %v478, 0.16666667
      %v690 = vadd.f32 %v658, %v674
      %v691 = vadd.f32 %v659, %v675
      %v692 = vadd.f32 %v660, %v676
      %v693 = vadd.f32 %v661, %v677
      %v694 = vadd.f32 %v662, %v678
      %v695 = vadd.f32 %v663, %v679
      %v696 = vadd.f32 %v664, %v680
      %v697 = vadd.f32 %v665, %v681
      %v698 = vadd.f32 %v666, %v682
      %v699 = vadd.f32 %v667, %v683
      %v700 = vadd.f32 %v668, %v684
      %v701 = vadd.f32 %v669, %v685
      %v702 = vadd.f32 %v670, %v686
      %v703 = vadd.f32 %v671, %v687
      %v704 = vadd.f32 %v672, %v688
      %v705 = vadd.f32 %v673, %v689
      %v706 = vmul.f32 %v175, 0.041666668
      %v707 = vmul.f32 %v176, 0.041666668
      %v708 = vmul.f32 %v177, 0.041666668
      %v709 = vmul.f32 %v178, 0.041666668
      %v710 = vmul.f32 %v179, 0.041666668
      %v711 = vmul.f32 %v180, 0.041666668
      %v712 = vmul.f32 %v181, 0.041666668
      %v713 = vmul.f32 %v182, 0.041666668
      %v714 = vmul.f32 %v183, 0.041666668
      %v715 = vmul.f32 %v184, 0.041666668
      %v716 = vmul.f32 %v185, 0.041666668
      %v717 = vmul.f32 %v186, 0.041666668
      %v718 = vmul.f32 %v187, 0.041666668
      %v719 = vmul.f32 %v188, 0.041666668
      %v720 = vmul.f32 %v189, 0.041666668
      %v721 = vmul.f32 %v190, 0.041666668
      %v722 = vmul.f32 %v127, 0.008333334
      %v723 = vmul.f32 %v128, 0.008333334
      %v724 = vmul.f32 %v129, 0.008333334
      %v725 = vmul.f32 %v130, 0.008333334
      %v726 = vmul.f32 %v131, 0.008333334
      %v727 = vmul.f32 %v132, 0.008333334
      %v728 = vmul.f32 %v133, 0.008333334
      %v729 = vmul.f32 %v134, 0.008333334
      %v730 = vmul.f32 %v135, 0.008333334
      %v731 = vmul.f32 %v136, 0.008333334
      %v732 = vmul.f32 %v137, 0.008333334
      %v733 = vmul.f32 %v138, 0.008333334
      %v734 = vmul.f32 %v139, 0.008333334
      %v735 = vmul.f32 %v140, 0.008333334
      %v736 = vmul.f32 %v141, 0.008333334
      %v737 = vmul.f32 %v142, 0.008333334
      %v738 = vadd.f32 %v706, %v722
      %v739 = vadd.f32 %v707, %v723
      %v740 = vadd.f32 %v708, %v724
      %v741 = vadd.f32 %v709, %v725
      %v742 = vadd.f32 %v710, %v726
      %v743 = vadd.f32 %v711, %v727
      %v744 = vadd.f32 %v712, %v728
      %v745 = vadd.f32 %v713, %v729
      %v746 = vadd.f32 %v714, %v730
      %v747 = vadd.f32 %v715, %v731
      %v748 = vadd.f32 %v716, %v732
      %v749 = vadd.f32 %v717, %v733
      %v750 = vadd.f32 %v718, %v734
      %v751 = vadd.f32 %v719, %v735
      %v752 = vadd.f32 %v720, %v736
      %v753 = vadd.f32 %v721, %v737
      %v754 = vmul.f32 %v258, 0.0013888889
      %v755 = vmul.f32 %v263, 0.0013888889
      %v756 = vmul.f32 %v268, 0.0013888889
      %v757 = vmul.f32 %v273, 0.0013888889
      %v758 = vmul.f32 %v278, 0.0013888889
      %v759 = vmul.f32 %v283, 0.0013888889
      %v760 = vmul.f32 %v288, 0.0013888889
      %v761 = vmul.f32 %v293, 0.0013888889
      %v762 = vmul.f32 %v298, 0.0013888889
      %v763 = vmul.f32 %v303, 0.0013888889
      %v764 = vmul.f32 %v308, 0.0013888889
      %v765 = vmul.f32 %v313, 0.0013888889
      %v766 = vmul.f32 %v318, 0.0013888889
      %v767 = vmul.f32 %v323, 0.0013888889
      %v768 = vmul.f32 %v328, 0.0013888889
      %v769 = vmul.f32 %v333, 0.0013888889
      %v770 = vadd.f32 %v738, %v754
      %v771 = vadd.f32 %v739, %v755
      %v772 = vadd.f32 %v740, %v756
      %v773 = vadd.f32 %v741, %v757
      %v774 = vadd.f32 %v742, %v758
      %v775 = vadd.f32 %v743, %v759
      %v776 = vadd.f32 %v744, %v760
      %v777 = vadd.f32 %v745, %v761
      %v778 = vadd.f32 %v746, %v762
      %v779 = vadd.f32 %v747, %v763
      %v780 = vadd.f32 %v748, %v764
      %v781 = vadd.f32 %v749, %v765
      %v782 = vadd.f32 %v750, %v766
      %v783 = vadd.f32 %v751, %v767
      %v784 = vadd.f32 %v752, %v768
      %v785 = vadd.f32 %v753, %v769
      %v786 = vmul.f32 %v403, 0.0001984127
      %v787 = vmul.f32 %v408, 0.0001984127
      %v788 = vmul.f32 %v413, 0.0001984127
      %v789 = vmul.f32 %v418, 0.0001984127
      %v790 = vmul.f32 %v423, 0.0001984127
      %v791 = vmul.f32 %v428, 0.0001984127
      %v792 = vmul.f32 %v433, 0.0001984127
      %v793 = vmul.f32 %v438, 0.0001984127
      %v794 = vmul.f32 %v443, 0.0001984127
      %v795 = vmul.f32 %v448, 0.0001984127
      %v796 = vmul.f32 %v453, 0.0001984127
      %v797 = vmul.f32 %v458, 0.0001984127
      %v798 = vmul.f32 %v463, 0.0001984127
      %v799 = vmul.f32 %v468, 0.0001984127
      %v800 = vmul.f32 %v473, 0.0001984127
      %v801 = vmul.f32 %v478, 0.0001984127
      %v802 = vadd.f32 %v770, %v786
      %v803 = vadd.f32 %v771, %v787
      %v804 = vadd.f32 %v772, %v788
      %v805 = vadd.f32 %v773, %v789
      %v806 = vadd.f32 %v774, %v790
      %v807 = vadd.f32 %v775, %v791
      %v808 = vadd.f32 %v776, %v792
      %v809 = vadd.f32 %v777, %v793
      %v810 = vadd.f32 %v778, %v794
      %v811 = vadd.f32 %v779, %v795
      %v812 = vadd.f32 %v780, %v796
      %v813 = vadd.f32 %v781, %v797
      %v814 = vadd.f32 %v782, %v798
      %v815 = vadd.f32 %v783, %v799
      %v816 = vadd.f32 %v784, %v800
      %v817 = vadd.f32 %v785, %v801
      %v818 = vmul.f32 %v175, 2.4801588e-05
      %v819 = vmul.f32 %v176, 2.4801588e-05
      %v820 = vmul.f32 %v177, 2.4801588e-05
      %v821 = vmul.f32 %v178, 2.4801588e-05
      %v822 = vmul.f32 %v179, 2.4801588e-05
      %v823 = vmul.f32 %v180, 2.4801588e-05
      %v824 = vmul.f32 %v181, 2.4801588e-05
      %v825 = vmul.f32 %v182, 2.4801588e-05
      %v826 = vmul.f32 %v183, 2.4801588e-05
      %v827 = vmul.f32 %v184, 2.4801588e-05
      %v828 = vmul.f32 %v185, 2.4801588e-05
      %v829 = vmul.f32 %v186, 2.4801588e-05
      %v830 = vmul.f32 %v187, 2.4801588e-05
      %v831 = vmul.f32 %v188, 2.4801588e-05
      %v832 = vmul.f32 %v189, 2.4801588e-05
      %v833 = vmul.f32 %v190, 2.4801588e-05
      %v834 = vmul.f32 %v127, 2.7557319e-06
      %v835 = vmul.f32 %v128, 2.7557319e-06
      %v836 = vmul.f32 %v129, 2.7557319e-06
      %v837 = vmul.f32 %v130, 2.7557319e-06
      %v838 = vmul.f32 %v131, 2.7557319e-06
      %v839 = vmul.f32 %v132, 2.7557319e-06
      %v840 = vmul.f32 %v133, 2.7557319e-06
      %v841 = vmul.f32 %v134, 2.7557319e-06
      %v842 = vmul.f32 %v135, 2.7557319e-06
      %v843 = vmul.f32 %v136, 2.7557319e-06
      %v844 = vmul.f32 %v137, 2.7557319e-06
      %v845 = vmul.f32 %v138, 2.7557319e-06
      %v846 = vmul.f32 %v139, 2.7557319e-06
      %v847 = vmul.f32 %v140, 2.7557319e-06
      %v848 = vmul.f32 %v141, 2.7557319e-06
      %v849 = vmul.f32 %v142, 2.7557319e-06
      %v850 = vadd.f32 %v818, %v834
      %v851 = vadd.f32 %v819, %v835
      %v852 = vadd.f32 %v820, %v836
      %v853 = vadd.f32 %v821, %v837
      %v854 = vadd.f32 %v822, %v838
      %v855 = vadd.f32 %v823, %v839
      %v856 = vadd.f32 %v824, %v840
      %v857 = vadd.f32 %v825, %v841
      %v858 = vadd.f32 %v826, %v842
      %v859 = vadd.f32 %v827, %v843
      %v860 = vadd.f32 %v828, %v844
      %v861 = vadd.f32 %v829, %v845
      %v862 = vadd.f32 %v830, %v846
      %v863 = vadd.f32 %v831, %v847
      %v864 = vadd.f32 %v832, %v848
      %v865 = vadd.f32 %v833, %v849
      %v866 = vmul.f32 %v258, 2.755732e-07
      %v867 = vmul.f32 %v263, 2.755732e-07
      %v868 = vmul.f32 %v268, 2.755732e-07
      %v869 = vmul.f32 %v273, 2.755732e-07
      %v870 = vmul.f32 %v278, 2.755732e-07
      %v871 = vmul.f32 %v283, 2.755732e-07
      %v872 = vmul.f32 %v288, 2.755732e-07
      %v873 = vmul.f32 %v293, 2.755732e-07
      %v874 = vmul.f32 %v298, 2.755732e-07
      %v875 = vmul.f32 %v303, 2.755732e-07
      %v876 = vmul.f32 %v308, 2.755732e-07
      %v877 = vmul.f32 %v313, 2.755732e-07
      %v878 = vmul.f32 %v318, 2.755732e-07
      %v879 = vmul.f32 %v323, 2.755732e-07
      %v880 = vmul.f32 %v328, 2.755732e-07
      %v881 = vmul.f32 %v333, 2.755732e-07
      %v882 = vadd.f32 %v850, %v866
      %v883 = vadd.f32 %v851, %v867
      %v884 = vadd.f32 %v852, %v868
      %v885 = vadd.f32 %v853, %v869
      %v886 = vadd.f32 %v854, %v870
      %v887 = vadd.f32 %v855, %v871
      %v888 = vadd.f32 %v856, %v872
      %v889 = vadd.f32 %v857, %v873
      %v890 = vadd.f32 %v858, %v874
      %v891 = vadd.f32 %v859, %v875
      %v892 = vadd.f32 %v860, %v876
      %v893 = vadd.f32 %v861, %v877
      %v894 = vadd.f32 %v862, %v878
      %v895 = vadd.f32 %v863, %v879
      %v896 = vadd.f32 %v864, %v880
      %v897 = vadd.f32 %v865, %v881
      %v898 = vmul.f32 %v403, 2.5052108e-08
      %v899 = vmul.f32 %v408, 2.5052108e-08
      %v900 = vmul.f32 %v413, 2.5052108e-08
      %v901 = vmul.f32 %v418, 2.5052108e-08
      %v902 = vmul.f32 %v423, 2.5052108e-08
      %v903 = vmul.f32 %v428, 2.5052108e-08
      %v904 = vmul.f32 %v433, 2.5052108e-08
      %v905 = vmul.f32 %v438, 2.5052108e-08
      %v906 = vmul.f32 %v443, 2.5052108e-08
      %v907 = vmul.f32 %v448, 2.5052108e-08
      %v908 = vmul.f32 %v453, 2.5052108e-08
      %v909 = vmul.f32 %v458, 2.5052108e-08
      %v910 = vmul.f32 %v463, 2.5052108e-08
      %v911 = vmul.f32 %v468, 2.5052108e-08
      %v912 = vmul.f32 %v473, 2.5052108e-08
      %v913 = vmul.f32 %v478, 2.5052108e-08
      %v914 = vadd.f32 %v882, %v898
      %v915 = vadd.f32 %v883, %v899
      %v916 = vadd.f32 %v884, %v900
      %v917 = vadd.f32 %v885, %v901
      %v918 = vadd.f32 %v886, %v902
      %v919 = vadd.f32 %v887, %v903
      %v920 = vadd.f32 %v888, %v904
      %v921 = vadd.f32 %v889, %v905
      %v922 = vadd.f32 %v890, %v906
      %v923 = vadd.f32 %v891, %v907
      %v924 = vadd.f32 %v892, %v908
      %v925 = vadd.f32 %v893, %v909
      %v926 = vadd.f32 %v894, %v910
      %v927 = vadd.f32 %v895, %v911
      %v928 = vadd.f32 %v896, %v912
      %v929 = vadd.f32 %v897, %v913
      %930 = vmatprep.subr.mxu0 0.0
      %931 = vmatpush1.msra.mxu0 %v914
      %932 = vmatprep.subr.mxu0 0.0
      %933 = vmatpush1.msra.mxu0 %v915
      %934 = vmatprep.subr.mxu0 0.0
      %935 = vmatpush1.msra.mxu0 %v916
      %936 = vmatprep.subr.mxu0 0.0
      %937 = vmatpush1.msra.mxu0 %v917
      %938 = vmatprep.subr.mxu0 0.0
      %939 = vmatpush1.msra.mxu0 %v918
      %940 = vmatprep.subr.mxu0 0.0
      %941 = vmatpush1.msra.mxu0 %v919
      %942 = vmatprep.subr.mxu0 0.0
      %943 = vmatpush1.msra.mxu0 %v920
      %944 = vmatprep.subr.mxu0 0.0
      %945 = vmatpush1.msra.mxu0 %v921
      %946 = vmatprep.subr.mxu0 0.0
      %947 = vmatpush1.msra.mxu0 %v922
      %948 = vmatprep.subr.mxu0 0.0
      %949 = vmatpush1.msra.mxu0 %v923
      %950 = vmatprep.subr.mxu0 0.0
      %951 = vmatpush1.msra.mxu0 %v924
      %952 = vmatprep.subr.mxu0 0.0
      %953 = vmatpush1.msra.mxu0 %v925
      %954 = vmatprep.subr.mxu0 0.0
      %955 = vmatpush1.msra.mxu0 %v926
      %956 = vmatprep.subr.mxu0 0.0
      %957 = vmatpush1.msra.mxu0 %v927
      %958 = vmatprep.subr.mxu0 0.0
      %959 = vmatpush1.msra.mxu0 %v928
      %960 = vmatprep.subr.mxu0 0.0
      %961 = vmatpush1.msra.mxu0 %v929
      %962 = vmatprep.subr.mxu0 0.0
      %963 = vmatpush1.msra.mxu0 0.0
      %964 = vmatprep.subr.mxu0 0.0
      %965 = vmatpush1.msra.mxu0 0.0
      %966 = vmatprep.subr.mxu0 0.0
      %967 = vmatpush1.msra.mxu0 0.0
      %968 = vmatprep.subr.mxu0 0.0
      %969 = vmatpush1.msra.mxu0 0.0
      %970 = vmatprep.subr.mxu0 0.0
      %971 = vmatpush1.msra.mxu0 0.0
      %972 = vmatprep.subr.mxu0 0.0
      %973 = vmatpush1.msra.mxu0 0.0
      %974 = vmatprep.subr.mxu0 0.0
      %975 = vmatpush1.msra.mxu0 0.0
      %976 = vmatprep.subr.mxu0 0.0
      %977 = vmatpush1.msra.mxu0 0.0
      %978 = vmatprep.subr.mxu0 0.0
      %979 = vmatpush1.msra.mxu0 0.0
      %980 = vmatprep.subr.mxu0 0.0
      %981 = vmatpush1.msra.mxu0 0.0
      %982 = vmatprep.subr.mxu0 0.0
      %983 = vmatpush1.msra.mxu0 0.0
      %984 = vmatprep.subr.mxu0 0.0
      %985 = vmatpush1.msra.mxu0 0.0
      %986 = vmatprep.subr.mxu0 0.0
      %987 = vmatpush1.msra.mxu0 0.0
      %988 = vmatprep.subr.mxu0 0.0
      %989 = vmatpush1.msra.mxu0 0.0
      %990 = vmatprep.subr.mxu0 0.0
      %991 = vmatpush1.msra.mxu0 0.0
      %992 = vmatprep.subr.mxu0 0.0
      %993 = vmatpush1.msra.mxu0 0.0
      %994 = vmatprep.mubr.f32.mxu0 0.0
      %995 = vmatmul.mubr.f32.gmra.mrb[0].mxu0 %v548
      %v996 = vpop.f32.mrb[0].mxu0
      %v997 = vadd.f32 0.0, %v996
      %v998 = vpop.f32.mrb[0].mxu0
      %999 = vmatprep.mubr.f32.mxu0 0.0
      %1000 = vmatmul.mubr.f32.gmra.mrb[0].mxu0 %v553
      %v1001 = vpop.f32.mrb[0].mxu0
      %v1002 = vadd.f32 0.0, %v1001
      %v1003 = vpop.f32.mrb[0].mxu0
      %1004 = vmatprep.mubr.f32.mxu0 0.0
      %1005 = vmatmul.mubr.f32.gmra.mrb[0].mxu0 %v558
      %v1006 = vpop.f32.mrb[0].mxu0
      %v1007 = vadd.f32 0.0, %v1006
      %v1008 = vpop.f32.mrb[0].mxu0
      %1009 = vmatprep.mubr.f32.mxu0 0.0
      %1010 = vmatmul.mubr.f32.gmra.mrb[0].mxu0 %v563
      %v1011 = vpop.f32.mrb[0].mxu0
      %v1012 = vadd.f32 0.0, %v1011
      %v1013 = vpop.f32.mrb[0].mxu0
      %1014 = vmatprep.mubr.f32.mxu0 0.0
      %1015 = vmatmul.mubr.f32.gmra.mrb[0].mxu0 %v568
      %v1016 = vpop.f32.mrb[0].mxu0
      %v1017 = vadd.f32 0.0, %v1016
      %v1018 = vpop.f32.mrb[0].mxu0
      %1019 = vmatprep.mubr.f32.mxu0 0.0
      %1020 = vmatmul.mubr.f32.gmra.mrb[0].mxu0 %v573
      %v1021 = vpop.f32.mrb[0].mxu0
      %v1022 = vadd.f32 0.0, %v1021
      %v1023 = vpop.f32.mrb[0].mxu0
      %1024 = vmatprep.mubr.f32.mxu0 0.0
      %1025 = vmatmul.mubr.f32.gmra.mrb[0].mxu0 %v578
      %v1026 = vpop.f32.mrb[0].mxu0
      %v1027 = vadd.f32 0.0, %v1026
      %v1028 = vpop.f32.mrb[0].mxu0
      %1029 = vmatprep.mubr.f32.mxu0 0.0
      %1030 = vmatmul.mubr.f32.gmra.mrb[0].mxu0 %v583
      %v1031 = vpop.f32.mrb[0].mxu0
      %v1032 = vadd.f32 0.0, %v1031
      %v1033 = vpop.f32.mrb[0].mxu0
      %1034 = vmatprep.mubr.f32.mxu0 0.0
      %1035 = vmatmul.mubr.f32.gmra.mrb[0].mxu0 %v588
      %v1036 = vpop.f32.mrb[0].mxu0
      %v1037 = vadd.f32 0.0, %v1036
      %v1038 = vpop.f32.mrb[0].mxu0
      %1039 = vmatprep.mubr.f32.mxu0 0.0
      %1040 = vmatmul.mubr.f32.gmra.mrb[0].mxu0 %v593
      %v1041 = vpop.f32.mrb[0].mxu0
      %v1042 = vadd.f32 0.0, %v1041
      %v1043 = vpop.f32.mrb[0].mxu0
      %1044 = vmatprep.mubr.f32.mxu0 0.0
      %1045 = vmatmul.mubr.f32.gmra.mrb[0].mxu0 %v598
      %v1046 = vpop.f32.mrb[0].mxu0
      %v1047 = vadd.f32 0.0, %v1046
      %v1048 = vpop.f32.mrb[0].mxu0
      %1049 = vmatprep.mubr.f32.mxu0 0.0
      %1050 = vmatmul.mubr.f32.gmra.mrb[0].mxu0 %v603
      %v1051 = vpop.f32.mrb[0].mxu0
      %v1052 = vadd.f32 0.0, %v1051
      %v1053 = vpop.f32.mrb[0].mxu0
      %1054 = vmatprep.mubr.f32.mxu0 0.0
      %1055 = vmatmul.mubr.f32.gmra.mrb[0].mxu0 %v608
      %v1056 = vpop.f32.mrb[0].mxu0
      %v1057 = vadd.f32 0.0, %v1056
      %v1058 = vpop.f32.mrb[0].mxu0
      %1059 = vmatprep.mubr.f32.mxu0 0.0
      %1060 = vmatmul.mubr.f32.gmra.mrb[0].mxu0 %v613
      %v1061 = vpop.f32.mrb[0].mxu0
      %v1062 = vadd.f32 0.0, %v1061
      %v1063 = vpop.f32.mrb[0].mxu0
      %1064 = vmatprep.mubr.f32.mxu0 0.0
      %1065 = vmatmul.mubr.f32.gmra.mrb[0].mxu0 %v618
      %v1066 = vpop.f32.mrb[0].mxu0
      %v1067 = vadd.f32 0.0, %v1066
      %v1068 = vpop.f32.mrb[0].mxu0
      %1069 = vmatprep.mubr.f32.mxu0 0.0
      %1070 = vmatmul.mubr.f32.gmra.mrb[0].mxu0 %v623
      %v1071 = vpop.f32.mrb[0].mxu0
      %v1072 = vadd.f32 0.0, %v1071
      %v1073 = vpop.f32.mrb[0].mxu0
      %1074 = vdwg.mxu0
      %v1075 = vadd.f32 %v802, %v997
      %v1076 = vadd.f32 %v803, %v1002
      %v1077 = vadd.f32 %v804, %v1007
      %v1078 = vadd.f32 %v805, %v1012
      %v1079 = vadd.f32 %v806, %v1017
      %v1080 = vadd.f32 %v807, %v1022
      %v1081 = vadd.f32 %v808, %v1027
      %v1082 = vadd.f32 %v809, %v1032
      %v1083 = vadd.f32 %v810, %v1037
      %v1084 = vadd.f32 %v811, %v1042
      %v1085 = vadd.f32 %v812, %v1047
      %v1086 = vadd.f32 %v813, %v1052
      %v1087 = vadd.f32 %v814, %v1057
      %v1088 = vadd.f32 %v815, %v1062
      %v1089 = vadd.f32 %v816, %v1067
      %v1090 = vadd.f32 %v817, %v1072
      %1091 = vmatprep.subr.mxu0 0.0
      %1092 = vmatpush1.msra.mxu0 %v1075
      %1093 = vmatprep.subr.mxu0 0.0
      %1094 = vmatpush1.msra.mxu0 %v1076
      %1095 = vmatprep.subr.mxu0 0.0
      %1096 = vmatpush1.msra.mxu0 %v1077
      %1097 = vmatprep.subr.mxu0 0.0
      %1098 = vmatpush1.msra.mxu0 %v1078
      %1099 = vmatprep.subr.mxu0 0.0
      %1100 = vmatpush1.msra.mxu0 %v1079
      %1101 = vmatprep.subr.mxu0 0.0
      %1102 = vmatpush1.msra.mxu0 %v1080
      %1103 = vmatprep.subr.mxu0 0.0
      %1104 = vmatpush1.msra.mxu0 %v1081
      %1105 = vmatprep.subr.mxu0 0.0
      %1106 = vmatpush1.msra.mxu0 %v1082
      %1107 = vmatprep.subr.mxu0 0.0
      %1108 = vmatpush1.msra.mxu0 %v1083
      %1109 = vmatprep.subr.mxu0 0.0
      %1110 = vmatpush1.msra.mxu0 %v1084
      %1111 = vmatprep.subr.mxu0 0.0
      %1112 = vmatpush1.msra.mxu0 %v1085
      %1113 = vmatprep.subr.mxu0 0.0
      %1114 = vmatpush1.msra.mxu0 %v1086
      %1115 = vmatprep.subr.mxu0 0.0
      %1116 = vmatpush1.msra.mxu0 %v1087
      %1117 = vmatprep.subr.mxu0 0.0
      %1118 = vmatpush1.msra.mxu0 %v1088
      %1119 = vmatprep.subr.mxu0 0.0
      %1120 = vmatpush1.msra.mxu0 %v1089
      %1121 = vmatprep.subr.mxu0 0.0
      %1122 = vmatpush1.msra.mxu0 %v1090
      %1123 = vmatprep.subr.mxu0 0.0
      %1124 = vmatpush1.msra.mxu0 0.0
      %1125 = vmatprep.subr.mxu0 0.0
      %1126 = vmatpush1.msra.mxu0 0.0
      %1127 = vmatprep.subr.mxu0 0.0
      %1128 = vmatpush1.msra.mxu0 0.0
      %1129 = vmatprep.subr.mxu0 0.0
      %1130 = vmatpush1.msra.mxu0 0.0
      %1131 = vmatprep.subr.mxu0 0.0
      %1132 = vmatpush1.msra.mxu0 0.0
      %1133 = vmatprep.subr.mxu0 0.0
      %1134 = vmatpush1.msra.mxu0 0.0
      %1135 = vmatprep.subr.mxu0 0.0
      %1136 = vmatpush1.msra.mxu0 0.0
      %1137 = vmatprep.subr.mxu0 0.0
      %1138 = vmatpush1.msra.mxu0 0.0
      %1139 = vmatprep.subr.mxu0 0.0
      %1140 = vmatpush1.msra.mxu0 0.0
      %1141 = vmatprep.subr.mxu0 0.0
      %1142 = vmatpush1.msra.mxu0 0.0
      %1143 = vmatprep.subr.mxu0 0.0
      %1144 = vmatpush1.msra.mxu0 0.0
      %1145 = vmatprep.subr.mxu0 0.0
      %1146 = vmatpush1.msra.mxu0 0.0
      %1147 = vmatprep.subr.mxu0 0.0
      %1148 = vmatpush1.msra.mxu0 0.0
      %1149 = vmatprep.subr.mxu0 0.0
      %1150 = vmatpush1.msra.mxu0 0.0
      %1151 = vmatprep.subr.mxu0 0.0
      %1152 = vmatpush1.msra.mxu0 0.0
      %1153 = vmatprep.subr.mxu0 0.0
      %1154 = vmatpush1.msra.mxu0 0.0
      %1155 = vmatprep.mubr.f32.mxu0 0.0
      %1156 = vmatmul.mubr.f32.gmra.mrb[0].mxu0 %v548
      %v1157 = vpop.f32.mrb[0].mxu0
      %v1158 = vadd.f32 0.0, %v1157
      %v1159 = vpop.f32.mrb[0].mxu0
      %1160 = vmatprep.mubr.f32.mxu0 0.0
      %1161 = vmatmul.mubr.f32.gmra.mrb[0].mxu0 %v553
      %v1162 = vpop.f32.mrb[0].mxu0
      %v1163 = vadd.f32 0.0, %v1162
      %v1164 = vpop.f32.mrb[0].mxu0
      %1165 = vmatprep.mubr.f32.mxu0 0.0
      %1166 = vmatmul.mubr.f32.gmra.mrb[0].mxu0 %v558
      %v1167 = vpop.f32.mrb[0].mxu0
      %v1168 = vadd.f32 0.0, %v1167
      %v1169 = vpop.f32.mrb[0].mxu0
      %1170 = vmatprep.mubr.f32.mxu0 0.0
      %1171 = vmatmul.mubr.f32.gmra.mrb[0].mxu0 %v563
      %v1172 = vpop.f32.mrb[0].mxu0
      %v1173 = vadd.f32 0.0, %v1172
      %v1174 = vpop.f32.mrb[0].mxu0
      %1175 = vmatprep.mubr.f32.mxu0 0.0
      %1176 = vmatmul.mubr.f32.gmra.mrb[0].mxu0 %v568
      %v1177 = vpop.f32.mrb[0].mxu0
      %v1178 = vadd.f32 0.0, %v1177
      %v1179 = vpop.f32.mrb[0].mxu0
      %1180 = vmatprep.mubr.f32.mxu0 0.0
      %1181 = vmatmul.mubr.f32.gmra.mrb[0].mxu0 %v573
      %v1182 = vpop.f32.mrb[0].mxu0
      %v1183 = vadd.f32 0.0, %v1182
      %v1184 = vpop.f32.mrb[0].mxu0
      %1185 = vmatprep.mubr.f32.mxu0 0.0
      %1186 = vmatmul.mubr.f32.gmra.mrb[0].mxu0 %v578
      %v1187 = vpop.f32.mrb[0].mxu0
      %v1188 = vadd.f32 0.0, %v1187
      %v1189 = vpop.f32.mrb[0].mxu0
      %1190 = vmatprep.mubr.f32.mxu0 0.0
      %1191 = vmatmul.mubr.f32.gmra.mrb[0].mxu0 %v583
      %v1192 = vpop.f32.mrb[0].mxu0
      %v1193 = vadd.f32 0.0, %v1192
      %v1194 = vpop.f32.mrb[0].mxu0
      %1195 = vmatprep.mubr.f32.mxu0 0.0
      %1196 = vmatmul.mubr.f32.gmra.mrb[0].mxu0 %v588
      %v1197 = vpop.f32.mrb[0].mxu0
      %v1198 = vadd.f32 0.0, %v1197
      %v1199 = vpop.f32.mrb[0].mxu0
      %1200 = vmatprep.mubr.f32.mxu0 0.0
      %1201 = vmatmul.mubr.f32.gmra.mrb[0].mxu0 %v593
      %v1202 = vpop.f32.mrb[0].mxu0
      %v1203 = vadd.f32 0.0, %v1202
      %v1204 = vpop.f32.mrb[0].mxu0
      %1205 = vmatprep.mubr.f32.mxu0 0.0
      %1206 = vmatmul.mubr.f32.gmra.mrb[0].mxu0 %v598
      %v1207 = vpop.f32.mrb[0].mxu0
      %v1208 = vadd.f32 0.0, %v1207
      %v1209 = vpop.f32.mrb[0].mxu0
      %1210 = vmatprep.mubr.f32.mxu0 0.0
      %1211 = vmatmul.mubr.f32.gmra.mrb[0].mxu0 %v603
      %v1212 = vpop.f32.mrb[0].mxu0
      %v1213 = vadd.f32 0.0, %v1212
      %v1214 = vpop.f32.mrb[0].mxu0
      %1215 = vmatprep.mubr.f32.mxu0 0.0
      %1216 = vmatmul.mubr.f32.gmra.mrb[0].mxu0 %v608
      %v1217 = vpop.f32.mrb[0].mxu0
      %v1218 = vadd.f32 0.0, %v1217
      %v1219 = vpop.f32.mrb[0].mxu0
      %1220 = vmatprep.mubr.f32.mxu0 0.0
      %1221 = vmatmul.mubr.f32.gmra.mrb[0].mxu0 %v613
      %v1222 = vpop.f32.mrb[0].mxu0
      %v1223 = vadd.f32 0.0, %v1222
      %v1224 = vpop.f32.mrb[0].mxu0
      %1225 = vmatprep.mubr.f32.mxu0 0.0
      %1226 = vmatmul.mubr.f32.gmra.mrb[0].mxu0 %v618
      %v1227 = vpop.f32.mrb[0].mxu0
      %v1228 = vadd.f32 0.0, %v1227
      %v1229 = vpop.f32.mrb[0].mxu0
      %1230 = vmatprep.mubr.f32.mxu0 0.0
      %1231 = vmatmul.mubr.f32.gmra.mrb[0].mxu0 %v623
      %v1232 = vpop.f32.mrb[0].mxu0
      %v1233 = vadd.f32 0.0, %v1232
      %v1234 = vpop.f32.mrb[0].mxu0
      %1235 = vdwg.mxu0
      %v1236 = vadd.f32 %v690, %v1158
      %v1237 = vadd.f32 %v691, %v1163
      %v1238 = vadd.f32 %v692, %v1168
      %v1239 = vadd.f32 %v693, %v1173
      %v1240 = vadd.f32 %v694, %v1178
      %v1241 = vadd.f32 %v695, %v1183
      %v1242 = vadd.f32 %v696, %v1188
      %v1243 = vadd.f32 %v697, %v1193
      %v1244 = vadd.f32 %v698, %v1198
      %v1245 = vadd.f32 %v699, %v1203
      %v1246 = vadd.f32 %v700, %v1208
      %v1247 = vadd.f32 %v701, %v1213
      %v1248 = vadd.f32 %v702, %v1218
      %v1249 = vadd.f32 %v703, %v1223
      %v1250 = vadd.f32 %v704, %v1228
      %v1251 = vadd.f32 %v705, %v1233
      %1252 = vst [vmem:[#allocation2] sm:$0xff] %v1236
      %1253 = vst [vmem:[#allocation2 + $0x8] sm:$0xff] %v1237
      %1254 = vst [vmem:[#allocation2 + $0x10] sm:$0xff] %v1238
      %1255 = vst [vmem:[#allocation2 + $0x18] sm:$0xff] %v1239
      %1256 = vst [vmem:[#allocation2 + $0x20] sm:$0xff] %v1240
      %1257 = vst [vmem:[#allocation2 + $0x28] sm:$0xff] %v1241
      %1258 = vst [vmem:[#allocation2 + $0x30] sm:$0xff] %v1242
      %1259 = vst [vmem:[#allocation2 + $0x38] sm:$0xff] %v1243
      %1260 = vst [vmem:[#allocation2 + $0x40] sm:$0xff] %v1244
      %1261 = vst [vmem:[#allocation2 + $0x48] sm:$0xff] %v1245
      %1262 = vst [vmem:[#allocation2 + $0x50] sm:$0xff] %v1246
      %1263 = vst [vmem:[#allocation2 + $0x58] sm:$0xff] %v1247
      %1264 = vst [vmem:[#allocation2 + $0x60] sm:$0xff] %v1248
      %1265 = vst [vmem:[#allocation2 + $0x68] sm:$0xff] %v1249
      %1266 = vst [vmem:[#allocation2 + $0x70] sm:$0xff] %v1250
      %1267 = vst [vmem:[#allocation2 + $0x78] sm:$0xff] %v1251
      %s1268 = sld [smem:[#allocation4]]
      // While loop
      $region22: #{tpu_custom_call.1} parent=20 // loop_pre_header
        _
      $region23: #{tpu_custom_call.1} parent=20 // loop_header
        %s1270 = sphi 0, %s1272
        %p1271 = scmp.ge.s32.totalorder %s1270, %s1268
      $region24: #{tpu_custom_call.1} parent=20 // loop_header_branch
        %1274 = sbr.rel (%p1271) target = $region28
      $region25: #{tpu_custom_call.1} parent=20 // loop_body
        %v1275 = vld [vmem:[#allocation2] sm:$0xff]
        %v1276 = vld [vmem:[#allocation2 + $0x8] sm:$0xff]
        %v1277 = vld [vmem:[#allocation2 + $0x10] sm:$0xff]
        %v1278 = vld [vmem:[#allocation2 + $0x18] sm:$0xff]
        %v1279 = vld [vmem:[#allocation2 + $0x20] sm:$0xff]
        %v1280 = vld [vmem:[#allocation2 + $0x28] sm:$0xff]
        %v1281 = vld [vmem:[#allocation2 + $0x30] sm:$0xff]
        %v1282 = vld [vmem:[#allocation2 + $0x38] sm:$0xff]
        %v1283 = vld [vmem:[#allocation2 + $0x40] sm:$0xff]
        %v1284 = vld [vmem:[#allocation2 + $0x48] sm:$0xff]
        %v1285 = vld [vmem:[#allocation2 + $0x50] sm:$0xff]
        %v1286 = vld [vmem:[#allocation2 + $0x58] sm:$0xff]
        %v1287 = vld [vmem:[#allocation2 + $0x60] sm:$0xff]
        %v1288 = vld [vmem:[#allocation2 + $0x68] sm:$0xff]
        %v1289 = vld [vmem:[#allocation2 + $0x70] sm:$0xff]
        %v1290 = vld [vmem:[#allocation2 + $0x78] sm:$0xff]
        %1291 = vmatprep.subr.mxu0 0.0
        %1292 = vmatpush1.msra.mxu0 %v1275
        %1293 = vmatprep.subr.mxu0 0.0
        %1294 = vmatpush1.msra.mxu0 %v1276
        %1295 = vmatprep.subr.mxu0 0.0
        %1296 = vmatpush1.msra.mxu0 %v1277
        %1297 = vmatprep.subr.mxu0 0.0
        %1298 = vmatpush1.msra.mxu0 %v1278
        %1299 = vmatprep.subr.mxu0 0.0
        %1300 = vmatpush1.msra.mxu0 %v1279
        %1301 = vmatprep.subr.mxu0 0.0
        %1302 = vmatpush1.msra.mxu0 %v1280
        %1303 = vmatprep.subr.mxu0 0.0
        %1304 = vmatpush1.msra.mxu0 %v1281
        %1305 = vmatprep.subr.mxu0 0.0
        %1306 = vmatpush1.msra.mxu0 %v1282
        %1307 = vmatprep.subr.mxu0 0.0
        %1308 = vmatpush1.msra.mxu0 %v1283
        %1309 = vmatprep.subr.mxu0 0.0
        %1310 = vmatpush1.msra.mxu0 %v1284
        %1311 = vmatprep.subr.mxu0 0.0
        %1312 = vmatpush1.msra.mxu0 %v1285
        %1313 = vmatprep.subr.mxu0 0.0
        %1314 = vmatpush1.msra.mxu0 %v1286
        %1315 = vmatprep.subr.mxu0 0.0
        %1316 = vmatpush1.msra.mxu0 %v1287
        %1317 = vmatprep.subr.mxu0 0.0
        %1318 = vmatpush1.msra.mxu0 %v1288
        %1319 = vmatprep.subr.mxu0 0.0
        %1320 = vmatpush1.msra.mxu0 %v1289
        %1321 = vmatprep.subr.mxu0 0.0
        %1322 = vmatpush1.msra.mxu0 %v1290
        %1323 = vmatprep.subr.mxu0 0.0
        %1324 = vmatpush1.msra.mxu0 0.0
        %1325 = vmatprep.subr.mxu0 0.0
        %1326 = vmatpush1.msra.mxu0 0.0
        %1327 = vmatprep.subr.mxu0 0.0
        %1328 = vmatpush1.msra.mxu0 0.0
        %1329 = vmatprep.subr.mxu0 0.0
        %1330 = vmatpush1.msra.mxu0 0.0
        %1331 = vmatprep.subr.mxu0 0.0
        %1332 = vmatpush1.msra.mxu0 0.0
        %1333 = vmatprep.subr.mxu0 0.0
        %1334 = vmatpush1.msra.mxu0 0.0
        %1335 = vmatprep.subr.mxu0 0.0
        %1336 = vmatpush1.msra.mxu0 0.0
        %1337 = vmatprep.subr.mxu0 0.0
        %1338 = vmatpush1.msra.mxu0 0.0
        %1339 = vmatprep.subr.mxu0 0.0
        %1340 = vmatpush1.msra.mxu0 0.0
        %1341 = vmatprep.subr.mxu0 0.0
        %1342 = vmatpush1.msra.mxu0 0.0
        %1343 = vmatprep.subr.mxu0 0.0
        %1344 = vmatpush1.msra.mxu0 0.0
        %1345 = vmatprep.subr.mxu0 0.0
        %1346 = vmatpush1.msra.mxu0 0.0
        %1347 = vmatprep.subr.mxu0 0.0
        %1348 = vmatpush1.msra.mxu0 0.0
        %1349 = vmatprep.subr.mxu0 0.0
        %1350 = vmatpush1.msra.mxu0 0.0
        %1351 = vmatprep.subr.mxu0 0.0
        %1352 = vmatpush1.msra.mxu0 0.0
        %1353 = vmatprep.subr.mxu0 0.0
        %1354 = vmatpush1.msra.mxu0 0.0
        %1355 = vmatprep.mubr.f32.mxu0 0.0
        %1356 = vmatmul.mubr.f32.gmra.mrb[0].mxu0 %v1275
        %v1357 = vpop.f32.mrb[0].mxu0
        %v1358 = vadd.f32 0.0, %v1357
        %v1359 = vpop.f32.mrb[0].mxu0
        %1360 = vmatprep.mubr.f32.mxu0 0.0
        %1361 = vmatmul.mubr.f32.gmra.mrb[0].mxu0 %v1276
        %v1362 = vpop.f32.mrb[0].mxu0
        %v1363 = vadd.f32 0.0, %v1362
        %v1364 = vpop.f32.mrb[0].mxu0
        %1365 = vmatprep.mubr.f32.mxu0 0.0
        %1366 = vmatmul.mubr.f32.gmra.mrb[0].mxu0 %v1277
        %v1367 = vpop.f32.mrb[0].mxu0
        %v1368 = vadd.f32 0.0, %v1367
        %v1369 = vpop.f32.mrb[0].mxu0
        %1370 = vmatprep.mubr.f32.mxu0 0.0
        %1371 = vmatmul.mubr.f32.gmra.mrb[0].mxu0 %v1278
        %v1372 = vpop.f32.mrb[0].mxu0
        %v1373 = vadd.f32 0.0, %v1372
        %v1374 = vpop.f32.mrb[0].mxu0
        %1375 = vmatprep.mubr.f32.mxu0 0.0
        %1376 = vmatmul.mubr.f32.gmra.mrb[0].mxu0 %v1279
        %v1377 = vpop.f32.mrb[0].mxu0
        %v1378 = vadd.f32 0.0, %v1377
        %v1379 = vpop.f32.mrb[0].mxu0
        %1380 = vmatprep.mubr.f32.mxu0 0.0
        %1381 = vmatmul.mubr.f32.gmra.mrb[0].mxu0 %v1280
        %v1382 = vpop.f32.mrb[0].mxu0
        %v1383 = vadd.f32 0.0, %v1382
        %v1384 = vpop.f32.mrb[0].mxu0
        %1385 = vmatprep.mubr.f32.mxu0 0.0
        %1386 = vmatmul.mubr.f32.gmra.mrb[0].mxu0 %v1281
        %v1387 = vpop.f32.mrb[0].mxu0
        %v1388 = vadd.f32 0.0, %v1387
        %v1389 = vpop.f32.mrb[0].mxu0
        %1390 = vmatprep.mubr.f32.mxu0 0.0
        %1391 = vmatmul.mubr.f32.gmra.mrb[0].mxu0 %v1282
        %v1392 = vpop.f32.mrb[0].mxu0
        %v1393 = vadd.f32 0.0, %v1392
        %v1394 = vpop.f32.mrb[0].mxu0
        %1395 = vmatprep.mubr.f32.mxu0 0.0
        %1396 = vmatmul.mubr.f32.gmra.mrb[0].mxu0 %v1283
        %v1397 = vpop.f32.mrb[0].mxu0
        %v1398 = vadd.f32 0.0, %v1397
        %v1399 = vpop.f32.mrb[0].mxu0
        %1400 = vmatprep.mubr.f32.mxu0 0.0
        %1401 = vmatmul.mubr.f32.gmra.mrb[0].mxu0 %v1284
        %v1402 = vpop.f32.mrb[0].mxu0
        %v1403 = vadd.f32 0.0, %v1402
        %v1404 = vpop.f32.mrb[0].mxu0
        %1405 = vmatprep.mubr.f32.mxu0 0.0
        %1406 = vmatmul.mubr.f32.gmra.mrb[0].mxu0 %v1285
        %v1407 = vpop.f32.mrb[0].mxu0
        %v1408 = vadd.f32 0.0, %v1407
        %v1409 = vpop.f32.mrb[0].mxu0
        %1410 = vmatprep.mubr.f32.mxu0 0.0
        %1411 = vmatmul.mubr.f32.gmra.mrb[0].mxu0 %v1286
        %v1412 = vpop.f32.mrb[0].mxu0
        %v1413 = vadd.f32 0.0, %v1412
        %v1414 = vpop.f32.mrb[0].mxu0
        %1415 = vmatprep.mubr.f32.mxu0 0.0
        %1416 = vmatmul.mubr.f32.gmra.mrb[0].mxu0 %v1287
        %v1417 = vpop.f32.mrb[0].mxu0
        %v1418 = vadd.f32 0.0, %v1417
        %v1419 = vpop.f32.mrb[0].mxu0
        %1420 = vmatprep.mubr.f32.mxu0 0.0
        %1421 = vmatmul.mubr.f32.gmra.mrb[0].mxu0 %v1288
        %v1422 = vpop.f32.mrb[0].mxu0
        %v1423 = vadd.f32 0.0, %v1422
        %v1424 = vpop.f32.mrb[0].mxu0
        %1425 = vmatprep.mubr.f32.mxu0 0.0
        %1426 = vmatmul.mubr.f32.gmra.mrb[0].mxu0 %v1289
        %v1427 = vpop.f32.mrb[0].mxu0
        %v1428 = vadd.f32 0.0, %v1427
        %v1429 = vpop.f32.mrb[0].mxu0
        %1430 = vmatprep.mubr.f32.mxu0 0.0
        %1431 = vmatmul.mubr.f32.gmra.mrb[0].mxu0 %v1290
        %v1432 = vpop.f32.mrb[0].mxu0
        %v1433 = vadd.f32 0.0, %v1432
        %v1434 = vpop.f32.mrb[0].mxu0
        %1435 = vdwg.mxu0
        %1436 = vst [vmem:[#allocation2] sm:$0xff] %v1358
        %1437 = vst [vmem:[#allocation2 + $0x8] sm:$0xff] %v1363
        %1438 = vst [vmem:[#allocation2 + $0x10] sm:$0xff] %v1368
        %1439 = vst [vmem:[#allocation2 + $0x18] sm:$0xff] %v1373
        %1440 = vst [vmem:[#allocation2 + $0x20] sm:$0xff] %v1378
        %1441 = vst [vmem:[#allocation2 + $0x28] sm:$0xff] %v1383
        %1442 = vst [vmem:[#allocation2 + $0x30] sm:$0xff] %v1388
        %1443 = vst [vmem:[#allocation2 + $0x38] sm:$0xff] %v1393
        %1444 = vst [vmem:[#allocation2 + $0x40] sm:$0xff] %v1398
        %1445 = vst [vmem:[#allocation2 + $0x48] sm:$0xff] %v1403
        %1446 = vst [vmem:[#allocation2 + $0x50] sm:$0xff] %v1408
        %1447 = vst [vmem:[#allocation2 + $0x58] sm:$0xff] %v1413
        %1448 = vst [vmem:[#allocation2 + $0x60] sm:$0xff] %v1418
        %1449 = vst [vmem:[#allocation2 + $0x68] sm:$0xff] %v1423
        %1450 = vst [vmem:[#allocation2 + $0x70] sm:$0xff] %v1428
        %1451 = vst [vmem:[#allocation2 + $0x78] sm:$0xff] %v1433
      $region26: #{tpu_custom_call.1} parent=20 // loop_footer
        %s1272 = sadd.s32 %s1270, 1
      $region27: #{tpu_custom_call.1} parent=20 // loop_footer_branch
        %1269 = sbr.rel target = $region23
      $region28: #{tpu_custom_call.1} parent=20 // loop_exit
        _
    $region21: #{tpu_custom_call.1} parent=1 // pred_fallthru
      _
    %v1452 = vld [vmem:[#allocation8] sm:$0xff]
    %v1453 = vld [vmem:[#allocation2] sm:$0xff]
    %v1454 = vld [vmem:[#allocation2 + $0x8] sm:$0xff]
    %v1455 = vld [vmem:[#allocation2 + $0x10] sm:$0xff]
    %v1456 = vld [vmem:[#allocation2 + $0x18] sm:$0xff]
    %v1457 = vld [vmem:[#allocation2 + $0x20] sm:$0xff]
    %v1458 = vld [vmem:[#allocation2 + $0x28] sm:$0xff]
    %v1459 = vld [vmem:[#allocation2 + $0x30] sm:$0xff]
    %v1460 = vld [vmem:[#allocation2 + $0x38] sm:$0xff]
    %v1461 = vld [vmem:[#allocation2 + $0x40] sm:$0xff]
    %v1462 = vld [vmem:[#allocation2 + $0x48] sm:$0xff]
    %v1463 = vld [vmem:[#allocation2 + $0x50] sm:$0xff]
    %v1464 = vld [vmem:[#allocation2 + $0x58] sm:$0xff]
    %v1465 = vld [vmem:[#allocation2 + $0x60] sm:$0xff]
    %v1466 = vld [vmem:[#allocation2 + $0x68] sm:$0xff]
    %v1467 = vld [vmem:[#allocation2 + $0x70] sm:$0xff]
    %v1468 = vld [vmem:[#allocation2 + $0x78] sm:$0xff]
    %1469 = vmatprep.subr.mxu0 0.0
    %1470 = vmatpush1.msra.mxu0 %v1453
    %1471 = vmatprep.subr.mxu0 0.0
    %1472 = vmatpush1.msra.mxu0 %v1454
    %1473 = vmatprep.subr.mxu0 0.0
    %1474 = vmatpush1.msra.mxu0 %v1455
    %1475 = vmatprep.subr.mxu0 0.0
    %1476 = vmatpush1.msra.mxu0 %v1456
    %1477 = vmatprep.subr.mxu0 0.0
    %1478 = vmatpush1.msra.mxu0 %v1457
    %1479 = vmatprep.subr.mxu0 0.0
    %1480 = vmatpush1.msra.mxu0 %v1458
    %1481 = vmatprep.subr.mxu0 0.0
    %1482 = vmatpush1.msra.mxu0 %v1459
    %1483 = vmatprep.subr.mxu0 0.0
    %1484 = vmatpush1.msra.mxu0 %v1460
    %1485 = vmatprep.subr.mxu0 0.0
    %1486 = vmatpush1.msra.mxu0 %v1461
    %1487 = vmatprep.subr.mxu0 0.0
    %1488 = vmatpush1.msra.mxu0 %v1462
    %1489 = vmatprep.subr.mxu0 0.0
    %1490 = vmatpush1.msra.mxu0 %v1463
    %1491 = vmatprep.subr.mxu0 0.0
    %1492 = vmatpush1.msra.mxu0 %v1464
    %1493 = vmatprep.subr.mxu0 0.0
    %1494 = vmatpush1.msra.mxu0 %v1465
    %1495 = vmatprep.subr.mxu0 0.0
    %1496 = vmatpush1.msra.mxu0 %v1466
    %1497 = vmatprep.subr.mxu0 0.0
    %1498 = vmatpush1.msra.mxu0 %v1467
    %1499 = vmatprep.subr.mxu0 0.0
    %1500 = vmatpush1.msra.mxu0 %v1468
    %1501 = vmatprep.subr.mxu0 0.0
    %1502 = vmatpush1.msra.mxu0 0.0
    %1503 = vmatprep.subr.mxu0 0.0
    %1504 = vmatpush1.msra.mxu0 0.0
    %1505 = vmatprep.subr.mxu0 0.0
    %1506 = vmatpush1.msra.mxu0 0.0
    %1507 = vmatprep.subr.mxu0 0.0
    %1508 = vmatpush1.msra.mxu0 0.0
    %1509 = vmatprep.subr.mxu0 0.0
    %1510 = vmatpush1.msra.mxu0 0.0
    %1511 = vmatprep.subr.mxu0 0.0
    %1512 = vmatpush1.msra.mxu0 0.0
    %1513 = vmatprep.subr.mxu0 0.0
    %1514 = vmatpush1.msra.mxu0 0.0
    %1515 = vmatprep.subr.mxu0 0.0
    %1516 = vmatpush1.msra.mxu0 0.0
    %1517 = vmatprep.subr.mxu0 0.0
    %1518 = vmatpush1.msra.mxu0 0.0
    %1519 = vmatprep.subr.mxu0 0.0
    %1520 = vmatpush1.msra.mxu0 0.0
    %1521 = vmatprep.subr.mxu0 0.0
    %1522 = vmatpush1.msra.mxu0 0.0
    %1523 = vmatprep.subr.mxu0 0.0
    %1524 = vmatpush1.msra.mxu0 0.0
    %1525 = vmatprep.subr.mxu0 0.0
    %1526 = vmatpush1.msra.mxu0 0.0
    %1527 = vmatprep.subr.mxu0 0.0
    %1528 = vmatpush1.msra.mxu0 0.0
    %1529 = vmatprep.subr.mxu0 0.0
    %1530 = vmatpush1.msra.mxu0 0.0
    %1531 = vmatprep.subr.mxu0 0.0
    %1532 = vmatpush1.msra.mxu0 0.0
    %1533 = vmatprep.mubr.f32.mxu0 0.0
    %1534 = vmatmul.mubr.f32.gmra.mrb[0].mxu0 %v1452
    %v1535 = vpop.f32.mrb[0].mxu0
    %v1536 = vadd.f32 0.0, %v1535
    %v1537 = vpop.f32.mrb[0].mxu0
    %1538 = vdwg.mxu0
    %1539 = vst [vmem:[#allocation10] sm:$0xff] %v1536
    // Predicated region
    $region29: #{tpu_custom_call.1} parent=1 // pred_check
      _
    $region30: #{tpu_custom_call.1} parent=1 // pred_check_branch
      %1541 = sbr.rel (0) target = $region32
    $region31: #{tpu_custom_call.1} parent=1 // pred_region
      %s1543 = ssub.s32 128, 128
      %1544 = vsyncadd [#allocation7], %s1543
      %s1546 = sshll.u32 [#allocation10], 4
      %s1547 = int_to_ptr.vmem [resolvable:$true] %s1546
      %1549 = dma.vmem_to_hbm [thread:$0]  %s1547, 128, %s3, [#allocation7]
    $region32: #{tpu_custom_call.1} parent=1 // pred_fallthru
      _
    // Predicated region
    $region33: #{tpu_custom_call.1} parent=1 // pred_check
      _
    $region34: #{tpu_custom_call.1} parent=1 // pred_check_branch
      %1551 = sbr.rel (0) target = $region36
    $region35: #{tpu_custom_call.1} parent=1 // pred_region
      %1552 = dma.done [#allocation7], 128
    $region36: #{tpu_custom_call.1} parent=1 // pred_fallthru
      _
    %1553 = vsyncpa [#allocation6], 1
    %1554 = vsyncpa [#allocation9], 1
    %1555 = vsyncpa [#allocation7], 1

</llo_original>
